<compile_context>
chip_gen: v7x
topology: tpu7x:2x2x1
jax: 0.10.0
libtpu: 0.0.40
codegen_flags: <defaults>
</compile_context>

<pallas_src>
import math

import jax
import jax.numpy as jnp
from jax.experimental import pallas as pl
from jax.experimental.pallas import tpu as pltpu


def _conv_bn_relu_kernel(x_ref, w_ref, sb_ref, o_ref):
    # x_ref:  (Bblk, H+2, W+2, Cin)  bf16, spatially pre-padded, NHWC
    # w_ref:  (3, 3, Cin, tco)       bf16 HWIO weights (resident across batch axis)
    # sb_ref: (2, tco)               f32 [scale; bias] (conv bias + BN folded)
    # o_ref:  (Bblk, H, W, tco)
    bblk, hp2, wp2, cin = x_ref.shape
    h, w = hp2 - 2, wp2 - 2
    tco = o_ref.shape[-1]
    n = bblk * h * wp2

    # Three dy row-slabs.  The dy slice lives on an untiled (leading) axis and the
    # reshape only collapses leading dims with the sublane dim (free when
    # (W+2) % 8 == 0, e.g. 14x14 ViT -> padded width 16), so the MXU operands are
    # built without the 9 per-tap strided-slice relayouts of the old kernel.
    slabs = [x_ref[:, dy:dy + h, :, :].reshape(n, cin) for dy in range(3)]

    # 3x3 conv = 9 bf16 matmuls (f32 accumulation), grouped by dx.
    parts = []
    for dx in range(3):
        p = jnp.dot(slabs[0], w_ref[0, dx], preferred_element_type=jnp.float32)
        p += jnp.dot(slabs[1], w_ref[1, dx], preferred_element_type=jnp.float32)
        p += jnp.dot(slabs[2], w_ref[2, dx], preferred_element_type=jnp.float32)
        parts.append(p.reshape(bblk, h, wp2, tco))

    # out[., y, x, :] = sum_dx parts[dx][., y, x + dx, :]  (dx shift applied once
    # per group on the f32 result instead of on every matmul operand).
    acc = (parts[0][:, :, 0:w, :]
           + parts[1][:, :, 1:w + 1, :]
           + parts[2][:, :, 2:w + 2, :])

    scale = sb_ref[0:1, :]            # (1, tco) -> broadcasts over all rows
    bias = sb_ref[1:2, :]
    y = jnp.maximum(acc * scale + bias, 0.0)   # fused BN + ReLU
    o_ref[...] = y.astype(o_ref.dtype)


def vit_center_block(x, conv_w, conv_b, bn_gamma, bn_beta, bn_mean, bn_var,
                     eps: float = 1e-5):
    """Pallas equivalent of ViTCenterBlock.forward (eval-mode BatchNorm).

    x:      (B, num_patch, Cin)
    conv_w: (Cout, Cin, 3, 3)   conv_b / bn_*: (Cout,)
    returns (B, Cout, H, W) with H = W = sqrt(num_patch)   (PyTorch NCHW layout)
    """
    b, p, cin = x.shape
    h = w = int(math.isqrt(p))
    assert h * w == p, "num_patch must be a perfect square"
    cout = conv_w.shape[0]

    # permute(0,2,1).view(B,C,H,W) in NCHW  <=>  reshape(B,H,W,C) in NHWC.
    # Cast to bf16 for the MXU and pad once (3x3, padding=1 "SAME").
    # TODO(synk): the SAME-pad and the final NCHW transpose are still separate XLA
    # copies (small vs. the conv); they could be folded into the kernel via manual
    # DMA / dropped if the consumer accepted NHWC.
    x_pad = jnp.pad(x.reshape(b, h, w, cin).astype(jnp.bfloat16),
                    ((0, 0), (1, 1), (1, 1), (0, 0)))

    # OIHW -> HWIO so every tap is a (Cin, tco) MXU operand, in bf16.
    w_hwio = jnp.transpose(conv_w, (2, 3, 1, 0)).astype(jnp.bfloat16)

    # Fold conv bias + BatchNorm (inference / running-stats form) into per-channel
    # scale & bias, shipped as a single (2, Cout) f32 operand.
    # TODO(synk): training-mode BatchNorm (per-batch statistics) is not implemented.
    scale = (bn_gamma / jnp.sqrt(bn_var + eps)).astype(jnp.float32)
    bias = ((conv_b - bn_mean) * scale + bn_beta).astype(jnp.float32)
    sb = jnp.stack([scale, bias], axis=0)                    # (2, Cout)

    # Cout tiling: keep the bf16 weight block resident (<= ~8 MiB, i.e. <= 16 MiB
    # double-buffered); prefer the full Cout, else multiples of 256 / 128 lanes.
    w_budget = 8 * 1024 * 1024
    tco = cout
    if 9 * cin * tco * 2 > w_budget:
        for cand in (512, 256, 128):
            if cout % cand == 0:
                tco = cand
                if 9 * cin * tco * 2 <= w_budget:
                    break
    n_co = cout // tco

    # Batch blocking: amortize the ~0.35us per-grid-step overhead, but keep >= 2
    # parallel grid steps so both TensorCores get work on multi-core parts (v7x).
    bblk = 2 if (b % 2 == 0 and (b // 2) * n_co >= 2) else 1
    n_b = b // bblk

    out_nhwc = pl.pallas_call(
        _conv_bn_relu_kernel,
        out_shape=jax.ShapeDtypeStruct((b, h, w, cout), x.dtype),
        grid_spec=pltpu.PrefetchScalarGridSpec(
            num_scalar_prefetch=0,
            # cout-tile axis OUTER, batch axis INNER -> the weight block index is
            # constant across the inner axis, so it is fetched n_co times total.
            grid=(n_co, n_b),
            in_specs=[
                pl.BlockSpec((bblk, h + 2, w + 2, cin),
                             lambda j, bi: (bi, 0, 0, 0)),
                pl.BlockSpec((3, 3, cin, tco),
                             lambda j, bi: (0, 0, 0, j)),
                pl.BlockSpec((2, tco), lambda j, bi: (0, j)),
            ],
            out_specs=pl.BlockSpec((bblk, h, w, tco),
                                   lambda j, bi: (bi, 0, 0, j)),
        ),
        compiler_params=pltpu.CompilerParams(
            dimension_semantics=("parallel", "parallel"),
            vmem_limit_bytes=48 * 1024 * 1024,   # fits resident bf16 weights + blocks on v5e/v6e/v7x
        ),
    )(x_pad, w_hwio, sb)

    # Back to the PyTorch module's NCHW output layout.
    return jnp.transpose(out_nhwc, (0, 3, 1, 2))


def _reference(x, conv_w, conv_b, bn_gamma, bn_beta, bn_mean, bn_var, eps=1e-5):
    """Pure-JAX reference mirroring the PyTorch forward (eval-mode BN, f32)."""
    b, p, cin = x.shape
    h = w = int(math.isqrt(p))
    x_nchw = jnp.transpose(x, (0, 2, 1)).reshape(b, cin, h, w)
    y = jax.lax.conv_general_dilated(
        x_nchw, conv_w, window_strides=(1, 1), padding="SAME",
        dimension_numbers=("NCHW", "OIHW", "NCHW"),
        precision=jax.lax.Precision.HIGHEST)
    y = y + conv_b.reshape(1, -1, 1, 1)
    y = (y - bn_mean.reshape(1, -1, 1, 1)) / jnp.sqrt(
        bn_var.reshape(1, -1, 1, 1) + eps)
    y = y * bn_gamma.reshape(1, -1, 1, 1) + bn_beta.reshape(1, -1, 1, 1)
    return jnp.maximum(y, 0.0)


if __name__ == "__main__":
    key = jax.random.PRNGKey(0)
    # Small shapes consistent with the module: B=2, num_patch=36 (6x6 tokens),
    # Cin=Cout=128 (exercises the lane-dense 128-channel path, padded width = 8).
    B, P, CIN, COUT = 2, 36, 128, 128
    H = W = 6
    ks = jax.random.split(key, 7)
    x = jax.random.normal(ks[0], (B, P, CIN), dtype=jnp.float32)
    conv_w = jax.random.normal(ks[1], (COUT, CIN, 3, 3), dtype=jnp.float32) * 0.05
    conv_b = jax.random.normal(ks[2], (COUT,), dtype=jnp.float32) * 0.1
    bn_gamma = 1.0 + 0.1 * jax.random.normal(ks[3], (COUT,), dtype=jnp.float32)
    bn_beta = 0.1 * jax.random.normal(ks[4], (COUT,), dtype=jnp.float32)
    bn_mean = 0.1 * jax.random.normal(ks[5], (COUT,), dtype=jnp.float32)
    bn_var = 0.9 + 0.1 * jnp.abs(jax.random.normal(ks[6], (COUT,), dtype=jnp.float32))

    y = vit_center_block(x, conv_w, conv_b, bn_gamma, bn_beta, bn_mean, bn_var)
    jax.block_until_ready(y)
    assert y.shape == (B, COUT, H, W)

    y_ref = _reference(x, conv_w, conv_b, bn_gamma, bn_beta, bn_mean, bn_var)
    # bf16 matmul operands (f32 accumulation) -> loosened tolerance vs. the f32 ref.
    assert jnp.allclose(y, y_ref, rtol=5e-2, atol=1e-1), float(
        jnp.max(jnp.abs(y - y_ref)))
    print("KERNEL_OK")
</pallas_src>

<mosaic_0001>
module attributes {stable_mosaic.version = 11 : i64} {
  func.func @_conv_bn_relu_kernel(%arg0: i32, %arg1: i32, %arg2: memref<1x8x8x128xbf16, #tpu.memory_space<vmem>>, %arg3: memref<3x3x128x128xbf16, #tpu.memory_space<vmem>>, %arg4: memref<2x128xf32, #tpu.memory_space<vmem>>, %arg5: memref<1x6x6x128xf32, #tpu.memory_space<vmem>>) attributes {dimension_semantics = [#tpu.dimension_semantics<parallel>, #tpu.dimension_semantics<parallel>], iteration_bounds = array<i64: 1, 2>, scalar_prefetch = 0 : i64, scratch_operands = 0 : i64, tpu.core_type = #tpu.core_type<tc>, window_params = [{transform_indices = @transform_0, window_bounds = array<i64: 1, 8, 8, 128>}, {transform_indices = @transform_1, window_bounds = array<i64: 3, 3, 128, 128>}, {transform_indices = @transform_2, window_bounds = array<i64: 2, 128>}, {transform_indices = @transform_3, window_bounds = array<i64: 1, 6, 6, 128>}]} {
    %c0 = arith.constant 0 : index
    %c0_0 = arith.constant 0 : index
    %c0_1 = arith.constant 0 : index
    %c0_2 = arith.constant 0 : index
    %0 = vector.load %arg2[%c0, %c0_0, %c0_1, %c0_2] : memref<1x8x8x128xbf16, #tpu.memory_space<vmem>>, vector<1x6x8x128xbf16>
    %1 = vector.shape_cast %0 : vector<1x6x8x128xbf16> to vector<48x128xbf16>
    %c0_3 = arith.constant 0 : index
    %c1 = arith.constant 1 : index
    %c0_4 = arith.constant 0 : index
    %c0_5 = arith.constant 0 : index
    %2 = vector.load %arg2[%c0_3, %c1, %c0_4, %c0_5] : memref<1x8x8x128xbf16, #tpu.memory_space<vmem>>, vector<1x6x8x128xbf16>
    %3 = vector.shape_cast %2 : vector<1x6x8x128xbf16> to vector<48x128xbf16>
    %c0_6 = arith.constant 0 : index
    %c2 = arith.constant 2 : index
    %c0_7 = arith.constant 0 : index
    %c0_8 = arith.constant 0 : index
    %4 = vector.load %arg2[%c0_6, %c2, %c0_7, %c0_8] : memref<1x8x8x128xbf16, #tpu.memory_space<vmem>>, vector<1x6x8x128xbf16>
    %5 = vector.shape_cast %4 : vector<1x6x8x128xbf16> to vector<48x128xbf16>
    %c0_9 = arith.constant 0 : index
    %c0_10 = arith.constant 0 : index
    %c0_11 = arith.constant 0 : index
    %c0_12 = arith.constant 0 : index
    %6 = vector.load %arg3[%c0_9, %c0_10, %c0_11, %c0_12] : memref<3x3x128x128xbf16, #tpu.memory_space<vmem>>, vector<1x1x128x128xbf16>
    %7 = vector.shape_cast %6 : vector<1x1x128x128xbf16> to vector<128x128xbf16>
    %cst = arith.constant dense<0.000000e+00> : vector<48x128xf32>
    %8 = tpu.matmul %1, %7, %cst {dimension_numbers = #tpu.dot_dimension_numbers<[1], [0], [0], [1], [0, 0, 1, 1], [], []>} : vector<48x128xbf16>, vector<128x128xbf16>, vector<48x128xf32> -> vector<48x128xf32>
    %c1_13 = arith.constant 1 : index
    %c0_14 = arith.constant 0 : index
    %c0_15 = arith.constant 0 : index
    %c0_16 = arith.constant 0 : index
    %9 = vector.load %arg3[%c1_13, %c0_14, %c0_15, %c0_16] : memref<3x3x128x128xbf16, #tpu.memory_space<vmem>>, vector<1x1x128x128xbf16>
    %10 = vector.shape_cast %9 : vector<1x1x128x128xbf16> to vector<128x128xbf16>
    %cst_17 = arith.constant dense<0.000000e+00> : vector<48x128xf32>
    %11 = tpu.matmul %3, %10, %cst_17 {dimension_numbers = #tpu.dot_dimension_numbers<[1], [0], [0], [1], [0, 0, 1, 1], [], []>} : vector<48x128xbf16>, vector<128x128xbf16>, vector<48x128xf32> -> vector<48x128xf32>
    %12 = arith.addf %8, %11 : vector<48x128xf32>
    %c2_18 = arith.constant 2 : index
    %c0_19 = arith.constant 0 : index
    %c0_20 = arith.constant 0 : index
    %c0_21 = arith.constant 0 : index
    %13 = vector.load %arg3[%c2_18, %c0_19, %c0_20, %c0_21] : memref<3x3x128x128xbf16, #tpu.memory_space<vmem>>, vector<1x1x128x128xbf16>
    %14 = vector.shape_cast %13 : vector<1x1x128x128xbf16> to vector<128x128xbf16>
    %cst_22 = arith.constant dense<0.000000e+00> : vector<48x128xf32>
    %15 = tpu.matmul %5, %14, %cst_22 {dimension_numbers = #tpu.dot_dimension_numbers<[1], [0], [0], [1], [0, 0, 1, 1], [], []>} : vector<48x128xbf16>, vector<128x128xbf16>, vector<48x128xf32> -> vector<48x128xf32>
    %16 = arith.addf %12, %15 : vector<48x128xf32>
    %17 = vector.shape_cast %16 : vector<48x128xf32> to vector<1x6x8x128xf32>
    %c0_23 = arith.constant 0 : index
    %c1_24 = arith.constant 1 : index
    %c0_25 = arith.constant 0 : index
    %c0_26 = arith.constant 0 : index
    %18 = vector.load %arg3[%c0_23, %c1_24, %c0_25, %c0_26] : memref<3x3x128x128xbf16, #tpu.memory_space<vmem>>, vector<1x1x128x128xbf16>
    %19 = vector.shape_cast %18 : vector<1x1x128x128xbf16> to vector<128x128xbf16>
    %cst_27 = arith.constant dense<0.000000e+00> : vector<48x128xf32>
    %20 = tpu.matmul %1, %19, %cst_27 {dimension_numbers = #tpu.dot_dimension_numbers<[1], [0], [0], [1], [0, 0, 1, 1], [], []>} : vector<48x128xbf16>, vector<128x128xbf16>, vector<48x128xf32> -> vector<48x128xf32>
    %c1_28 = arith.constant 1 : index
    %c1_29 = arith.constant 1 : index
    %c0_30 = arith.constant 0 : index
    %c0_31 = arith.constant 0 : index
    %21 = vector.load %arg3[%c1_28, %c1_29, %c0_30, %c0_31] : memref<3x3x128x128xbf16, #tpu.memory_space<vmem>>, vector<1x1x128x128xbf16>
    %22 = vector.shape_cast %21 : vector<1x1x128x128xbf16> to vector<128x128xbf16>
    %cst_32 = arith.constant dense<0.000000e+00> : vector<48x128xf32>
    %23 = tpu.matmul %3, %22, %cst_32 {dimension_numbers = #tpu.dot_dimension_numbers<[1], [0], [0], [1], [0, 0, 1, 1], [], []>} : vector<48x128xbf16>, vector<128x128xbf16>, vector<48x128xf32> -> vector<48x128xf32>
    %24 = arith.addf %20, %23 : vector<48x128xf32>
    %c2_33 = arith.constant 2 : index
    %c1_34 = arith.constant 1 : index
    %c0_35 = arith.constant 0 : index
    %c0_36 = arith.constant 0 : index
    %25 = vector.load %arg3[%c2_33, %c1_34, %c0_35, %c0_36] : memref<3x3x128x128xbf16, #tpu.memory_space<vmem>>, vector<1x1x128x128xbf16>
    %26 = vector.shape_cast %25 : vector<1x1x128x128xbf16> to vector<128x128xbf16>
    %cst_37 = arith.constant dense<0.000000e+00> : vector<48x128xf32>
    %27 = tpu.matmul %5, %26, %cst_37 {dimension_numbers = #tpu.dot_dimension_numbers<[1], [0], [0], [1], [0, 0, 1, 1], [], []>} : vector<48x128xbf16>, vector<128x128xbf16>, vector<48x128xf32> -> vector<48x128xf32>
    %28 = arith.addf %24, %27 : vector<48x128xf32>
    %29 = vector.shape_cast %28 : vector<48x128xf32> to vector<1x6x8x128xf32>
    %c0_38 = arith.constant 0 : index
    %c2_39 = arith.constant 2 : index
    %c0_40 = arith.constant 0 : index
    %c0_41 = arith.constant 0 : index
    %30 = vector.load %arg3[%c0_38, %c2_39, %c0_40, %c0_41] : memref<3x3x128x128xbf16, #tpu.memory_space<vmem>>, vector<1x1x128x128xbf16>
    %31 = vector.shape_cast %30 : vector<1x1x128x128xbf16> to vector<128x128xbf16>
    %cst_42 = arith.constant dense<0.000000e+00> : vector<48x128xf32>
    %32 = tpu.matmul %1, %31, %cst_42 {dimension_numbers = #tpu.dot_dimension_numbers<[1], [0], [0], [1], [0, 0, 1, 1], [], []>} : vector<48x128xbf16>, vector<128x128xbf16>, vector<48x128xf32> -> vector<48x128xf32>
    %c1_43 = arith.constant 1 : index
    %c2_44 = arith.constant 2 : index
    %c0_45 = arith.constant 0 : index
    %c0_46 = arith.constant 0 : index
    %33 = vector.load %arg3[%c1_43, %c2_44, %c0_45, %c0_46] : memref<3x3x128x128xbf16, #tpu.memory_space<vmem>>, vector<1x1x128x128xbf16>
    %34 = vector.shape_cast %33 : vector<1x1x128x128xbf16> to vector<128x128xbf16>
    %cst_47 = arith.constant dense<0.000000e+00> : vector<48x128xf32>
    %35 = tpu.matmul %3, %34, %cst_47 {dimension_numbers = #tpu.dot_dimension_numbers<[1], [0], [0], [1], [0, 0, 1, 1], [], []>} : vector<48x128xbf16>, vector<128x128xbf16>, vector<48x128xf32> -> vector<48x128xf32>
    %36 = arith.addf %32, %35 : vector<48x128xf32>
    %c2_48 = arith.constant 2 : index
    %c2_49 = arith.constant 2 : index
    %c0_50 = arith.constant 0 : index
    %c0_51 = arith.constant 0 : index
    %37 = vector.load %arg3[%c2_48, %c2_49, %c0_50, %c0_51] : memref<3x3x128x128xbf16, #tpu.memory_space<vmem>>, vector<1x1x128x128xbf16>
    %38 = vector.shape_cast %37 : vector<1x1x128x128xbf16> to vector<128x128xbf16>
    %cst_52 = arith.constant dense<0.000000e+00> : vector<48x128xf32>
    %39 = tpu.matmul %5, %38, %cst_52 {dimension_numbers = #tpu.dot_dimension_numbers<[1], [0], [0], [1], [0, 0, 1, 1], [], []>} : vector<48x128xbf16>, vector<128x128xbf16>, vector<48x128xf32> -> vector<48x128xf32>
    %40 = arith.addf %36, %39 : vector<48x128xf32>
    %41 = vector.shape_cast %40 : vector<48x128xf32> to vector<1x6x8x128xf32>
    %42 = vector.extract_strided_slice %17 {offsets = [0, 0, 0, 0], sizes = [1, 6, 6, 128], strides = [1, 1, 1, 1]} : vector<1x6x8x128xf32> to vector<1x6x6x128xf32>
    %43 = vector.extract_strided_slice %29 {offsets = [0, 0, 1, 0], sizes = [1, 6, 6, 128], strides = [1, 1, 1, 1]} : vector<1x6x8x128xf32> to vector<1x6x6x128xf32>
    %44 = arith.addf %42, %43 : vector<1x6x6x128xf32>
    %45 = vector.extract_strided_slice %41 {offsets = [0, 0, 2, 0], sizes = [1, 6, 6, 128], strides = [1, 1, 1, 1]} : vector<1x6x8x128xf32> to vector<1x6x6x128xf32>
    %46 = arith.addf %44, %45 : vector<1x6x6x128xf32>
    %c0_53 = arith.constant 0 : index
    %c0_54 = arith.constant 0 : index
    %47 = vector.load %arg4[%c0_53, %c0_54] : memref<2x128xf32, #tpu.memory_space<vmem>>, vector<1x128xf32>
    %c1_55 = arith.constant 1 : index
    %c0_56 = arith.constant 0 : index
    %48 = vector.load %arg4[%c1_55, %c0_56] : memref<2x128xf32, #tpu.memory_space<vmem>>, vector<1x128xf32>
    %49 = vector.shape_cast %47 : vector<1x128xf32> to vector<1x1x1x128xf32>
    %50 = vector.broadcast %49 : vector<1x1x1x128xf32> to vector<1x6x6x128xf32>
    %51 = arith.mulf %46, %50 : vector<1x6x6x128xf32>
    %52 = vector.shape_cast %48 : vector<1x128xf32> to vector<1x1x1x128xf32>
    %53 = vector.broadcast %52 : vector<1x1x1x128xf32> to vector<1x6x6x128xf32>
    %54 = arith.addf %51, %53 : vector<1x6x6x128xf32>
    %cst_57 = arith.constant 0.000000e+00 : f32
    %55 = vector.broadcast %cst_57 : f32 to vector<1x6x6x128xf32>
    %56 = arith.maximumf %54, %55 : vector<1x6x6x128xf32>
    %c0_58 = arith.constant 0 : index
    %c0_59 = arith.constant 0 : index
    %c0_60 = arith.constant 0 : index
    %c0_61 = arith.constant 0 : index
    %57 = vector.load %arg5[%c0_58, %c0_59, %c0_60, %c0_61] : memref<1x6x6x128xf32, #tpu.memory_space<vmem>>, vector<1x6x6x128xf32>
    tpu.vector_store %arg5[%c0_58, %c0_59, %c0_60, %c0_61], %56 {strides = array<i32>} : memref<1x6x6x128xf32, #tpu.memory_space<vmem>>, vector<1x6x6x128xf32>,
    return
  }
  func.func @transform_0(%arg0: i32, %arg1: i32) -> (i32, i32, i32, i32) {
    %c0_i32 = arith.constant 0 : i32
    %c0_i32_0 = arith.constant 0 : i32
    %c0_i32_1 = arith.constant 0 : i32
    %c0_i32_2 = arith.constant 0 : i32
    return %arg1, %c0_i32, %c0_i32_0, %c0_i32_1 : i32, i32, i32, i32
  }
  func.func @transform_1(%arg0: i32, %arg1: i32) -> (i32, i32, i32, i32) {
    %c0_i32 = arith.constant 0 : i32
    %c0_i32_0 = arith.constant 0 : i32
    %c0_i32_1 = arith.constant 0 : i32
    %c0_i32_2 = arith.constant 0 : i32
    return %c0_i32, %c0_i32_0, %c0_i32_1, %arg0 : i32, i32, i32, i32
  }
  func.func @transform_2(%arg0: i32, %arg1: i32) -> (i32, i32) {
    %c0_i32 = arith.constant 0 : i32
    %c0_i32_0 = arith.constant 0 : i32
    return %c0_i32, %arg0 : i32, i32
  }
  func.func @transform_3(%arg0: i32, %arg1: i32) -> (i32, i32, i32, i32) {
    %c0_i32 = arith.constant 0 : i32
    %c0_i32_0 = arith.constant 0 : i32
    %c0_i32_1 = arith.constant 0 : i32
    return %arg1, %c0_i32, %c0_i32_0, %arg0 : i32, i32, i32, i32
  }
}

</mosaic_0001>

<llo_original>
// kernel: tpu_custom_call.1
$region0: #{tpu_custom_call.1}
  #allocation0 [shape = 'u32[]', space=smem, size = 0x4, offset = 0x4, fixed_abs, tag = 'smem constant byte address 0x4 - core index']
  #allocation1 [shape = 'u32[144,128]{1,0:T(1,128)}', space=vmem, size = 0x12000, scoped, tag = 'internal scratch']
  %s0 = inlined_call_operand.hbm [shape: bf16[2,8,8,128], index: 0, kind: input, shape index: {}]
  %s1 = inlined_call_operand.hbm [shape: bf16[3,3,128,128], index: 1, kind: input, shape index: {}]
  %s2 = inlined_call_operand.vmem [shape: f32[2,128], index: 2, kind: input, shape index: {}]
  %s3 = inlined_call_operand.vmem [shape: f32[2,6,6,128], index: 3, kind: output, shape index: {}]
  %s4 = sld [smem:[#allocation0]]
  $region53: #{tpu_custom_call.1} parent=0
    _
  %s6 = ssub.s32 1, %s4
  %s7 = scalar_select 0, %s6, %s4
  $region1: #{tpu_custom_call.1} parent=0
    #allocation2 [shape = 'u8[32768]{0}', space=vmem, size = 0x8000, scoped, tag = 'input window, operand 0']
    #allocation3 [shape = 's32[2]{0}', space=sflag, size = 0x8, scoped, tag = 'scoped memory for tpu_custom_call.1']
    #allocation4 [shape = 'u8[294912]{0}', space=vmem, size = 0x48000, scoped, tag = 'input window, operand 1, single buffered']
    #allocation5 [shape = 's32[1]{0}', space=sflag, size = 0x4, scoped, tag = 'scoped memory for tpu_custom_call.1']
    %8 = vsyncpa [#allocation3], 0
    %s9 = scalar_lea.sflag [#allocation3], 1
    %10 = vsyncpa %s9, 0
    %11 = vsyncpa [#allocation5], 0
    loop: start=0, step=1, limit=4
    $region2: #{tpu_custom_call.1} parent=1 // loop_pre_header
      _
    $region3: #{tpu_custom_call.1} parent=1 // loop_header
      %s13 = sphi 0, %s17
      %p14 = scmp.ge.s32.totalorder %s13, 4
      %s20 = sphi 0, %s32
      %s21 = sphi 0, %s28
      %s22 = sphi 0, %s20
      %s23 = sphi 0, %s21
      %s24 = sphi 0, %s22
      %s25 = sphi 0, %s23
      %s35 = sphi 0, %s37
      %s38 = sphi 0, %s35
      %s39 = sphi 0, %s38
      %s55 = sphi 0, %s39
      %s61 = sphi 0, %s63
      %s64 = sphi 0, %s61
      %s65 = sphi 0, %s64
      %s81 = sphi 0, %s65
      %s87 = sphi 0, %s89
      %s90 = sphi 0, %s87
      %s91 = sphi 0, %s90
      %s107 = sphi 0, %s91
      %s115 = sphi 0, %s117
      %s118 = sphi 0, %s115
      %s119 = sphi 0, %s118
      %s135 = sphi 0, %s119
    $region4: #{tpu_custom_call.1} parent=1 // loop_header_branch
      %16 = sbr.rel (%p14) target = $region8
    $region5: #{tpu_custom_call.1} parent=1 // loop_body
      %s18 = ssub.s32 %s13, 1
      %s19 = ssub.s32 %s13, 2
      %s26 = sadd.s32 1, %s21
      %p27 = scmp.ge.s32.totalorder %s26, 2
      %s28 = scalar_select %p27, 0, %s26
      %s29 = sadd.s32 1, %s20
      %s30 = scalar_select %p27, %s29, %s20
      %p31 = scmp.ge.s32.totalorder %s30, 1
      %s32 = scalar_select %p31, 0, %s30
      %s33 = ssub.s32 %s21, %s28
      %p34 = scmp.eq.s32.totalorder %s33, 0
      %s36 = sadd.s32 %s35, 1
      %s37 = scalar_select %p34, %s35, %s36
      %p40 = pneg %p34
      %p41 = scmp.eq.s32.totalorder %s13, 1
      %p42 = por %p40, %p41
      %p43 = scmp.ne.s32.totalorder %s35, %s38
      %p44 = scmp.eq.s32.totalorder %s13, 0
      %p45 = por %p43, %p44
      %p46 = scmp.ne.s32.totalorder %s35, %s38
      %p47 = scmp.eq.s32.totalorder %s18, 1
      %p48 = por %p46, %p47
      %p49 = scmp.ne.s32.totalorder %s38, %s39
      %p50 = scmp.eq.s32.totalorder %s18, 0
      %p51 = por %p49, %p50
      %p52 = scmp.ne.s32.totalorder %s38, %s39
      %p53 = scmp.eq.s32.totalorder %s19, 1
      %p54 = por %p52, %p53
      %p56 = scmp.ne.s32.totalorder %s39, %s55
      %p57 = scmp.eq.s32.totalorder %s19, 0
      %p58 = por %p56, %p57
      %s59 = ssub.s32 %s20, %s32
      %p60 = scmp.eq.s32.totalorder %s59, 0
      %s62 = sadd.s32 %s61, 1
      %s63 = scalar_select %p60, %s61, %s62
      %p66 = pneg %p60
      %p67 = scmp.eq.s32.totalorder %s13, 1
      %p68 = por %p66, %p67
      %p69 = scmp.ne.s32.totalorder %s61, %s64
      %p70 = scmp.eq.s32.totalorder %s13, 0
      %p71 = por %p69, %p70
      %p72 = scmp.ne.s32.totalorder %s61, %s64
      %p73 = scmp.eq.s32.totalorder %s18, 1
      %p74 = por %p72, %p73
      %p75 = scmp.ne.s32.totalorder %s64, %s65
      %p76 = scmp.eq.s32.totalorder %s18, 0
      %p77 = por %p75, %p76
      %p78 = scmp.ne.s32.totalorder %s64, %s65
      %p79 = scmp.eq.s32.totalorder %s19, 1
      %p80 = por %p78, %p79
      %p82 = scmp.ne.s32.totalorder %s65, %s81
      %p83 = scmp.eq.s32.totalorder %s19, 0
      %p84 = por %p82, %p83
      %s85 = ssub.s32 %s20, %s32
      %p86 = scmp.eq.s32.totalorder %s85, 0
      %s88 = sadd.s32 %s87, 1
      %s89 = scalar_select %p86, %s87, %s88
      %p92 = pneg %p86
      %p93 = scmp.eq.s32.totalorder %s13, 1
      %p94 = por %p92, %p93
      %p95 = scmp.ne.s32.totalorder %s87, %s90
      %p96 = scmp.eq.s32.totalorder %s13, 0
      %p97 = por %p95, %p96
      %p98 = scmp.ne.s32.totalorder %s87, %s90
      %p99 = scmp.eq.s32.totalorder %s18, 1
      %p100 = por %p98, %p99
      %p101 = scmp.ne.s32.totalorder %s90, %s91
      %p102 = scmp.eq.s32.totalorder %s18, 0
      %p103 = por %p101, %p102
      %p104 = scmp.ne.s32.totalorder %s90, %s91
      %p105 = scmp.eq.s32.totalorder %s19, 1
      %p106 = por %p104, %p105
      %p108 = scmp.ne.s32.totalorder %s91, %s107
      %p109 = scmp.eq.s32.totalorder %s19, 0
      %p110 = por %p108, %p109
      %s111 = ssub.s32 %s21, %s28
      %s112 = ssub.s32 %s20, %s32
      %s113 = sor.u32 %s111, %s112
      %p114 = scmp.eq.s32.totalorder %s113, 0
      %s116 = sadd.s32 %s115, 1
      %s117 = scalar_select %p114, %s115, %s116
      %p120 = pneg %p114
      %p121 = scmp.eq.s32.totalorder %s13, 1
      %p122 = por %p120, %p121
      %p123 = scmp.ne.s32.totalorder %s115, %s118
      %p124 = scmp.eq.s32.totalorder %s13, 0
      %p125 = por %p123, %p124
      %p126 = scmp.ne.s32.totalorder %s115, %s118
      %p127 = scmp.eq.s32.totalorder %s18, 1
      %p128 = por %p126, %p127
      %p129 = scmp.ne.s32.totalorder %s118, %s119
      %p130 = scmp.eq.s32.totalorder %s18, 0
      %p131 = por %p129, %p130
      %p132 = scmp.ne.s32.totalorder %s118, %s119
      %p133 = scmp.eq.s32.totalorder %s19, 1
      %p134 = por %p132, %p133
      %p136 = scmp.ne.s32.totalorder %s119, %s135
      %p137 = scmp.eq.s32.totalorder %s19, 0
      %p138 = por %p136, %p137
      %p139 = scmp.le.s32.totalorder 1, %s13
      %p140 = scmp.lt.s32.totalorder %s13, 3
      %p141 = pnand %p139, %p140
      %p142 = pneg %p141
      // Predicated region
      $region9: #{tpu_custom_call.1} parent=5 // pred_check
        _
      $region10: #{tpu_custom_call.1} parent=5 // pred_check_branch
        %144 = sbr.rel (%p141) target = $region12
      $region11: #{tpu_custom_call.1} parent=5 // pred_region
        %s145 = ssub.s32 %s13, 1
        // Predicated region
        $region13: #{tpu_custom_call.1} parent=11 // pred_check
          %p146 = pneg %p77
        $region14: #{tpu_custom_call.1} parent=11 // pred_check_branch
          %148 = sbr.rel (%p146) target = $region16
        $region15: #{tpu_custom_call.1} parent=11 // pred_region
          %s150 = ssub.s32 9216, 9216
          %151 = vsyncadd [#allocation5], %s150
          %s152 = smul.addr %s22, 64
          %s153 = scalar_lea.hbm %s1, %s152
          %s154 = sshll.u32 [#allocation4], 4
          %s155 = int_to_ptr.vmem [resolvable:$true] %s154
          %160 = dma.hbm_to_vmem [thread:$0]  %s153, 9216, %s155, [#allocation5], 64, 64, 4
        $region16: #{tpu_custom_call.1} parent=11 // pred_fallthru
          _
        // Predicated region
        $region17: #{tpu_custom_call.1} parent=11 // pred_check
          %p161 = pneg %p103
        $region18: #{tpu_custom_call.1} parent=11 // pred_check_branch
          %163 = sbr.rel (%p161) target = $region20
        $region19: #{tpu_custom_call.1} parent=11 // pred_region
          %p164 = scmp.lt.s32.totalorder %s22, 0
          %s165 = scalar_select %p164, %s22, 0
          %s166 = smul.addr %s165, 2
          %s167 = scalar_lea.vmem %s2, %s166
        $region20: #{tpu_custom_call.1} parent=11 // pred_fallthru
          _
      $region12: #{tpu_custom_call.1} parent=5 // pred_fallthru
        _
      %p168 = scmp.lt.s32.totalorder %s13, 2
      // Predicated region
      $region21: #{tpu_custom_call.1} parent=5 // pred_check
        %p169 = pneg %p168
      $region22: #{tpu_custom_call.1} parent=5 // pred_check_branch
        %171 = sbr.rel (%p169) target = $region24
      $region23: #{tpu_custom_call.1} parent=5 // pred_region
        // Predicated region
        $region25: #{tpu_custom_call.1} parent=23 // pred_check
          %p172 = pneg %p45
        $region26: #{tpu_custom_call.1} parent=23 // pred_check_branch
          %174 = sbr.rel (%p172) target = $region28
        $region27: #{tpu_custom_call.1} parent=23 // pred_region
          %s175 = sand.u32 %s35, 1
          %s176 = scalar_lea.sflag [#allocation3], %s175
          %s177 = sand.u32 %s35, 1
          %s178 = smul.addr %s177, 32
          %s179 = scalar_lea.vmem [#allocation2], %s178
          %s181 = ssub.s32 512, 512
          %182 = vsyncadd %s176, %s181
          %s183 = smul.addr %s21, 8
          %s184 = smul.addr %s183, 64
          %s185 = scalar_lea.hbm %s0, %s184
          %s186 = sshll.u32 %s179, 4
          %s187 = int_to_ptr.vmem [resolvable:$true] %s186
          %192 = dma.hbm_to_vmem [thread:$0]  %s185, 512, %s187, %s176, 64, 64, 4
        $region28: #{tpu_custom_call.1} parent=23 // pred_fallthru
          _
      $region24: #{tpu_custom_call.1} parent=5 // pred_fallthru
        _
      %p193 = scmp.le.s32.totalorder 1, %s13
      %p194 = scmp.lt.s32.totalorder %s13, 3
      %p195 = pnand %p193, %p194
      %p196 = pneg %p195
      // Predicated region
      $region29: #{tpu_custom_call.1} parent=5 // pred_check
        _
      $region30: #{tpu_custom_call.1} parent=5 // pred_check_branch
        %198 = sbr.rel (%p195) target = $region32
      $region31: #{tpu_custom_call.1} parent=5 // pred_region
        %s199 = ssub.s32 %s13, 1
        %s200 = sand.u32 %s38, 1
        %s201 = scalar_lea.sflag [#allocation3], %s200
        %s202 = sand.u32 %s38, 1
        %s203 = smul.addr %s202, 32
        %s204 = scalar_lea.vmem [#allocation2], %s203
        // Predicated region
        $region33: #{tpu_custom_call.1} parent=31 // pred_check
          %p205 = pneg %p51
        $region34: #{tpu_custom_call.1} parent=31 // pred_check_branch
          %207 = sbr.rel (%p205) target = $region36
        $region35: #{tpu_custom_call.1} parent=31 // pred_region
          %208 = dma.done %s201, 512
        $region36: #{tpu_custom_call.1} parent=31 // pred_fallthru
          _
        // Predicated region
        $region37: #{tpu_custom_call.1} parent=31 // pred_check
          %p209 = pneg %p77
        $region38: #{tpu_custom_call.1} parent=31 // pred_check_branch
          %211 = sbr.rel (%p209) target = $region40
        $region39: #{tpu_custom_call.1} parent=31 // pred_region
          %212 = dma.done [#allocation5], 9216
        $region40: #{tpu_custom_call.1} parent=31 // pred_fallthru
          _
        %s213 = sand.u32 %s38, 1
        %s214 = scalar_lea.sflag [#allocation3], %s213
        %s215 = sand.u32 %s38, 1
        %s216 = smul.addr %s215, 32
        %s217 = scalar_lea.vmem [#allocation2], %s216
        %p218 = pneg %p51
        %p219 = pneg %p48
        %p220 = pneg %p77
        %p221 = pneg %p74
        %p222 = scmp.lt.s32.totalorder %s22, 0
        %s223 = scalar_select %p222, %s22, 0
        %s224 = smul.addr %s223, 2
        %s225 = scalar_lea.vmem %s2, %s224
        %p226 = pneg %p103
        %p227 = pneg %p100
        %p228 = pneg %p131
        %p229 = pneg %p128
        %p230 = scmp.lt.s32.totalorder %s23, 1
        %s231 = scalar_select %p230, %s23, 1
        %p232 = scmp.lt.s32.totalorder %s22, 0
        %s233 = scalar_select %p232, %s22, 0
        %s234 = smul.addr %s231, 6
        %s235 = sadd.s32 %s233, %s234
        %s236 = smul.addr %s235, 8
        %s237 = scalar_lea.vmem %s3, %s236
        %p238 = scmp.lt.s32.totalorder %s22, 0
        %s239 = scalar_select %p238, %s22, 0
        %s240 = smul.addr %s239, 2
        %s241 = scalar_lea.vmem %s2, %s240
        %p242 = scmp.lt.s32.totalorder %s23, 1
        %s243 = scalar_select %p242, %s23, 1
        %p244 = scmp.lt.s32.totalorder %s22, 0
        %s245 = scalar_select %p244, %s22, 0
        %s246 = smul.addr %s243, 6
        %s247 = sadd.s32 %s245, %s246
        %s248 = smul.addr %s247, 8
        %s249 = scalar_lea.vmem %s3, %s248
        %v251 = vld [vmem:[%s204] sm:$0xf]
        %v252 = vld [vmem:[%s204 + $0x4] sm:$0xf]
        %v253 = vld [vmem:[%s204 + $0x8] sm:$0xf]
        %v254 = vld [vmem:[%s204 + $0xc] sm:$0xf]
        %v255 = vld [vmem:[%s204 + $0x10] sm:$0xf]
        %v256 = vld [vmem:[%s204 + $0x14] sm:$0xf]
        %s257 = scalar_lea.vmem %s204, 4 [#allocation2]
        %v258 = vld [vmem:[%s257] sm:$0xf]
        %v259 = vld [vmem:[%s257 + $0x4] sm:$0xf]
        %v260 = vld [vmem:[%s257 + $0x8] sm:$0xf]
        %v261 = vld [vmem:[%s257 + $0xc] sm:$0xf]
        %v262 = vld [vmem:[%s257 + $0x10] sm:$0xf]
        %v263 = vld [vmem:[%s257 + $0x14] sm:$0xf]
        %s264 = scalar_lea.vmem %s204, 8 [#allocation2]
        %v265 = vld [vmem:[%s264] sm:$0xf]
        %v266 = vld [vmem:[%s264 + $0x4] sm:$0xf]
        %v267 = vld [vmem:[%s264 + $0x8] sm:$0xf]
        %v268 = vld [vmem:[%s264 + $0xc] sm:$0xf]
        %v269 = vld [vmem:[%s264 + $0x10] sm:$0xf]
        %v270 = vld [vmem:[%s264 + $0x14] sm:$0xf]
        %v271 = vld [vmem:[#allocation4] sm:$0xf]
        %v272 = vld [vmem:[#allocation4 + $0x4] sm:$0xf]
        %v273 = vld [vmem:[#allocation4 + $0x8] sm:$0xf]
        %v274 = vld [vmem:[#allocation4 + $0xc] sm:$0xf]
        %v275 = vld [vmem:[#allocation4 + $0x10] sm:$0xf]
        %v276 = vld [vmem:[#allocation4 + $0x14] sm:$0xf]
        %v277 = vld [vmem:[#allocation4 + $0x18] sm:$0xf]
        %v278 = vld [vmem:[#allocation4 + $0x1c] sm:$0xf]
        %v279 = vld [vmem:[#allocation4 + $0x20] sm:$0xf]
        %v280 = vld [vmem:[#allocation4 + $0x24] sm:$0xf]
        %v281 = vld [vmem:[#allocation4 + $0x28] sm:$0xf]
        %v282 = vld [vmem:[#allocation4 + $0x2c] sm:$0xf]
        %v283 = vld [vmem:[#allocation4 + $0x30] sm:$0xf]
        %v284 = vld [vmem:[#allocation4 + $0x34] sm:$0xf]
        %v285 = vld [vmem:[#allocation4 + $0x38] sm:$0xf]
        %v286 = vld [vmem:[#allocation4 + $0x3c] sm:$0xf]
        %s287 = scalar_lea.vmem [#allocation4], 192
        %v288 = vld [vmem:[%s287] sm:$0xf]
        %v289 = vld [vmem:[%s287 + $0x4] sm:$0xf]
        %v290 = vld [vmem:[%s287 + $0x8] sm:$0xf]
        %v291 = vld [vmem:[%s287 + $0xc] sm:$0xf]
        %v292 = vld [vmem:[%s287 + $0x10] sm:$0xf]
        %v293 = vld [vmem:[%s287 + $0x14] sm:$0xf]
        %v294 = vld [vmem:[%s287 + $0x18] sm:$0xf]
        %v295 = vld [vmem:[%s287 + $0x1c] sm:$0xf]
        %v296 = vld [vmem:[%s287 + $0x20] sm:$0xf]
        %v297 = vld [vmem:[%s287 + $0x24] sm:$0xf]
        %v298 = vld [vmem:[%s287 + $0x28] sm:$0xf]
        %v299 = vld [vmem:[%s287 + $0x2c] sm:$0xf]
        %v300 = vld [vmem:[%s287 + $0x30] sm:$0xf]
        %v301 = vld [vmem:[%s287 + $0x34] sm:$0xf]
        %v302 = vld [vmem:[%s287 + $0x38] sm:$0xf]
        %v303 = vld [vmem:[%s287 + $0x3c] sm:$0xf]
        %v310 = vunpack.c.l.b16 %v258
        %v311 = vunpack.c.l.b16 %v259
        %v312 = vunpack.c.l.b16 %v260
        %v313 = vunpack.c.l.b16 %v261
        %v314 = vunpack.c.l.b16 %v262
        %v315 = vunpack.c.l.b16 %v263
        %v316 = vpack.c.b16 %v311, %v310
        %v317 = vpack.c.b16 %v313, %v312
        %v318 = vpack.c.b16 %v315, %v314
        %v338 = vunpack.c.l.b16 %v288
        %v339 = vunpack.c.l.b16 %v289
        %v340 = vunpack.c.l.b16 %v290
        %v341 = vunpack.c.l.b16 %v291
        %v342 = vunpack.c.l.b16 %v292
        %v343 = vunpack.c.l.b16 %v293
        %v344 = vunpack.c.l.b16 %v294
        %v345 = vunpack.c.l.b16 %v295
        %v346 = vunpack.c.l.b16 %v296
        %v347 = vunpack.c.l.b16 %v297
        %v348 = vunpack.c.l.b16 %v298
        %v349 = vunpack.c.l.b16 %v299
        %v350 = vunpack.c.l.b16 %v300
        %v351 = vunpack.c.l.b16 %v301
        %v352 = vunpack.c.l.b16 %v302
        %v353 = vunpack.c.l.b16 %v303
        %v354 = vpack.c.b16 %v339, %v338
        %v355 = vpack.c.b16 %v341, %v340
        %v356 = vpack.c.b16 %v343, %v342
        %v357 = vpack.c.b16 %v345, %v344
        %v358 = vpack.c.b16 %v347, %v346
        %v359 = vpack.c.b16 %v349, %v348
        %v360 = vpack.c.b16 %v351, %v350
        %v361 = vpack.c.b16 %v353, %v352
        %370 = vmatprep.subr.bf16.mxu0 0
        %371 = vmatpush1.bf16.msra.mxu0 %v354
        %372 = vmatprep.subr.bf16.mxu0 0
        %373 = vmatpush1.bf16.msra.mxu0 %v355
        %374 = vmatprep.subr.bf16.mxu0 0
        %375 = vmatpush1.bf16.msra.mxu0 %v356
        %376 = vmatprep.subr.bf16.mxu0 0
        %377 = vmatpush1.bf16.msra.mxu0 %v357
        %378 = vmatprep.subr.bf16.mxu0 0
        %379 = vmatpush1.bf16.msra.mxu0 %v358
        %380 = vmatprep.subr.bf16.mxu0 0
        %381 = vmatpush1.bf16.msra.mxu0 %v359
        %382 = vmatprep.subr.bf16.mxu0 0
        %383 = vmatpush1.bf16.msra.mxu0 %v360
        %384 = vmatprep.subr.bf16.mxu0 0
        %385 = vmatpush1.bf16.msra.mxu0 %v361
        %386 = vmatprep.subr.bf16.mxu0 0
        %387 = vmatpush1.bf16.msra.mxu0 0
        %388 = vmatprep.subr.bf16.mxu0 0
        %389 = vmatpush1.bf16.msra.mxu0 0
        %390 = vmatprep.subr.bf16.mxu0 0
        %391 = vmatpush1.bf16.msra.mxu0 0
        %392 = vmatprep.subr.bf16.mxu0 0
        %393 = vmatpush1.bf16.msra.mxu0 0
        %394 = vmatprep.subr.bf16.mxu0 0
        %395 = vmatpush1.bf16.msra.mxu0 0
        %396 = vmatprep.subr.bf16.mxu0 0
        %397 = vmatpush1.bf16.msra.mxu0 0
        %398 = vmatprep.subr.bf16.mxu0 0
        %399 = vmatpush1.bf16.msra.mxu0 0
        %400 = vmatprep.subr.bf16.mxu0 0
        %401 = vmatpush1.bf16.msra.mxu0 0
        %402 = vmatprep.mubr.bf16.mxu0 0
        %403 = vmatmul.mubr.bf16.gmra.mrb[0].mxu0 %v316
        %v404 = vpop.f32.mrb[0].mxu0
        %v405 = vadd.f32 0.0, %v404
        %v406 = vpop.f32.mrb[0].mxu0
        %v407 = vpop.f32.mrb[0].mxu0
        %v408 = vadd.f32 0.0, %v407
        %v409 = vpop.f32.mrb[0].mxu0
        %410 = vmatprep.mubr.bf16.mxu0 0
        %411 = vmatmul.mubr.bf16.gmra.mrb[0].mxu0 %v317
        %v412 = vpop.f32.mrb[0].mxu0
        %v413 = vadd.f32 0.0, %v412
        %v414 = vpop.f32.mrb[0].mxu0
        %v415 = vpop.f32.mrb[0].mxu0
        %v416 = vadd.f32 0.0, %v415
        %v417 = vpop.f32.mrb[0].mxu0
        %418 = vmatprep.mubr.bf16.mxu0 0
        %419 = vmatmul.mubr.bf16.gmra.mrb[0].mxu0 %v318
        %v420 = vpop.f32.mrb[0].mxu0
        %v421 = vadd.f32 0.0, %v420
        %v422 = vpop.f32.mrb[0].mxu0
        %v423 = vpop.f32.mrb[0].mxu0
        %v424 = vadd.f32 0.0, %v423
        %v425 = vpop.f32.mrb[0].mxu0
        %426 = vdwg.mxu0
        %v433 = vunpack.c.l.b16 %v251
        %v434 = vunpack.c.l.b16 %v252
        %v435 = vunpack.c.l.b16 %v253
        %v436 = vunpack.c.l.b16 %v254
        %v437 = vunpack.c.l.b16 %v255
        %v438 = vunpack.c.l.b16 %v256
        %v439 = vpack.c.b16 %v434, %v433
        %v440 = vpack.c.b16 %v436, %v435
        %v441 = vpack.c.b16 %v438, %v437
        %v461 = vunpack.c.l.b16 %v271
        %v462 = vunpack.c.l.b16 %v272
        %v463 = vunpack.c.l.b16 %v273
        %v464 = vunpack.c.l.b16 %v274
        %v465 = vunpack.c.l.b16 %v275
        %v466 = vunpack.c.l.b16 %v276
        %v467 = vunpack.c.l.b16 %v277
        %v468 = vunpack.c.l.b16 %v278
        %v469 = vunpack.c.l.b16 %v279
        %v470 = vunpack.c.l.b16 %v280
        %v471 = vunpack.c.l.b16 %v281
        %v472 = vunpack.c.l.b16 %v282
        %v473 = vunpack.c.l.b16 %v283
        %v474 = vunpack.c.l.b16 %v284
        %v475 = vunpack.c.l.b16 %v285
        %v476 = vunpack.c.l.b16 %v286
        %v477 = vpack.c.b16 %v462, %v461
        %v478 = vpack.c.b16 %v464, %v463
        %v479 = vpack.c.b16 %v466, %v465
        %v480 = vpack.c.b16 %v468, %v467
        %v481 = vpack.c.b16 %v470, %v469
        %v482 = vpack.c.b16 %v472, %v471
        %v483 = vpack.c.b16 %v474, %v473
        %v484 = vpack.c.b16 %v476, %v475
        %493 = vmatprep.subr.bf16.mxu0 0
        %494 = vmatpush1.bf16.msra.mxu0 %v477
        %495 = vmatprep.subr.bf16.mxu0 0
        %496 = vmatpush1.bf16.msra.mxu0 %v478
        %497 = vmatprep.subr.bf16.mxu0 0
        %498 = vmatpush1.bf16.msra.mxu0 %v479
        %499 = vmatprep.subr.bf16.mxu0 0
        %500 = vmatpush1.bf16.msra.mxu0 %v480
        %501 = vmatprep.subr.bf16.mxu0 0
        %502 = vmatpush1.bf16.msra.mxu0 %v481
        %503 = vmatprep.subr.bf16.mxu0 0
        %504 = vmatpush1.bf16.msra.mxu0 %v482
        %505 = vmatprep.subr.bf16.mxu0 0
        %506 = vmatpush1.bf16.msra.mxu0 %v483
        %507 = vmatprep.subr.bf16.mxu0 0
        %508 = vmatpush1.bf16.msra.mxu0 %v484
        %509 = vmatprep.subr.bf16.mxu0 0
        %510 = vmatpush1.bf16.msra.mxu0 0
        %511 = vmatprep.subr.bf16.mxu0 0
        %512 = vmatpush1.bf16.msra.mxu0 0
        %513 = vmatprep.subr.bf16.mxu0 0
        %514 = vmatpush1.bf16.msra.mxu0 0
        %515 = vmatprep.subr.bf16.mxu0 0
        %516 = vmatpush1.bf16.msra.mxu0 0
        %517 = vmatprep.subr.bf16.mxu0 0
        %518 = vmatpush1.bf16.msra.mxu0 0
        %519 = vmatprep.subr.bf16.mxu0 0
        %520 = vmatpush1.bf16.msra.mxu0 0
        %521 = vmatprep.subr.bf16.mxu0 0
        %522 = vmatpush1.bf16.msra.mxu0 0
        %523 = vmatprep.subr.bf16.mxu0 0
        %524 = vmatpush1.bf16.msra.mxu0 0
        %525 = vmatprep.mubr.bf16.mxu0 0
        %526 = vmatmul.mubr.bf16.gmra.mrb[0].mxu0 %v439
        %v527 = vpop.f32.mrb[0].mxu0
        %v528 = vadd.f32 %v405, %v527
        %v529 = vpop.f32.mrb[0].mxu0
        %v530 = vpop.f32.mrb[0].mxu0
        %v531 = vadd.f32 %v408, %v530
        %v532 = vpop.f32.mrb[0].mxu0
        %533 = vmatprep.mubr.bf16.mxu0 0
        %534 = vmatmul.mubr.bf16.gmra.mrb[0].mxu0 %v440
        %v535 = vpop.f32.mrb[0].mxu0
        %v536 = vadd.f32 %v413, %v535
        %v537 = vpop.f32.mrb[0].mxu0
        %v538 = vpop.f32.mrb[0].mxu0
        %v539 = vadd.f32 %v416, %v538
        %v540 = vpop.f32.mrb[0].mxu0
        %541 = vmatprep.mubr.bf16.mxu0 0
        %542 = vmatmul.mubr.bf16.gmra.mrb[0].mxu0 %v441
        %v543 = vpop.f32.mrb[0].mxu0
        %v544 = vadd.f32 %v421, %v543
        %v545 = vpop.f32.mrb[0].mxu0
        %v546 = vpop.f32.mrb[0].mxu0
        %v547 = vadd.f32 %v424, %v546
        %v548 = vpop.f32.mrb[0].mxu0
        %549 = vdwg.mxu0
        %s550 = scalar_lea.vmem [#allocation4], 384
        %v551 = vld [vmem:[%s550] sm:$0xf]
        %v552 = vld [vmem:[%s550 + $0x4] sm:$0xf]
        %v553 = vld [vmem:[%s550 + $0x8] sm:$0xf]
        %v554 = vld [vmem:[%s550 + $0xc] sm:$0xf]
        %v555 = vld [vmem:[%s550 + $0x10] sm:$0xf]
        %v556 = vld [vmem:[%s550 + $0x14] sm:$0xf]
        %v557 = vld [vmem:[%s550 + $0x18] sm:$0xf]
        %v558 = vld [vmem:[%s550 + $0x1c] sm:$0xf]
        %v559 = vld [vmem:[%s550 + $0x20] sm:$0xf]
        %v560 = vld [vmem:[%s550 + $0x24] sm:$0xf]
        %v561 = vld [vmem:[%s550 + $0x28] sm:$0xf]
        %v562 = vld [vmem:[%s550 + $0x2c] sm:$0xf]
        %v563 = vld [vmem:[%s550 + $0x30] sm:$0xf]
        %v564 = vld [vmem:[%s550 + $0x34] sm:$0xf]
        %v565 = vld [vmem:[%s550 + $0x38] sm:$0xf]
        %v566 = vld [vmem:[%s550 + $0x3c] sm:$0xf]
        %v573 = vunpack.c.l.b16 %v265
        %v574 = vunpack.c.l.b16 %v266
        %v575 = vunpack.c.l.b16 %v267
        %v576 = vunpack.c.l.b16 %v268
        %v577 = vunpack.c.l.b16 %v269
        %v578 = vunpack.c.l.b16 %v270
        %v579 = vpack.c.b16 %v574, %v573
        %v580 = vpack.c.b16 %v576, %v575
        %v581 = vpack.c.b16 %v578, %v577
        %v601 = vunpack.c.l.b16 %v551
        %v602 = vunpack.c.l.b16 %v552
        %v603 = vunpack.c.l.b16 %v553
        %v604 = vunpack.c.l.b16 %v554
        %v605 = vunpack.c.l.b16 %v555
        %v606 = vunpack.c.l.b16 %v556
        %v607 = vunpack.c.l.b16 %v557
        %v608 = vunpack.c.l.b16 %v558
        %v609 = vunpack.c.l.b16 %v559
        %v610 = vunpack.c.l.b16 %v560
        %v611 = vunpack.c.l.b16 %v561
        %v612 = vunpack.c.l.b16 %v562
        %v613 = vunpack.c.l.b16 %v563
        %v614 = vunpack.c.l.b16 %v564
        %v615 = vunpack.c.l.b16 %v565
        %v616 = vunpack.c.l.b16 %v566
        %v617 = vpack.c.b16 %v602, %v601
        %v618 = vpack.c.b16 %v604, %v603
        %v619 = vpack.c.b16 %v606, %v605
        %v620 = vpack.c.b16 %v608, %v607
        %v621 = vpack.c.b16 %v610, %v609
        %v622 = vpack.c.b16 %v612, %v611
        %v623 = vpack.c.b16 %v614, %v613
        %v624 = vpack.c.b16 %v616, %v615
        %633 = vmatprep.subr.bf16.mxu0 0
        %634 = vmatpush1.bf16.msra.mxu0 %v617
        %635 = vmatprep.subr.bf16.mxu0 0
        %636 = vmatpush1.bf16.msra.mxu0 %v618
        %637 = vmatprep.subr.bf16.mxu0 0
        %638 = vmatpush1.bf16.msra.mxu0 %v619
        %639 = vmatprep.subr.bf16.mxu0 0
        %640 = vmatpush1.bf16.msra.mxu0 %v620
        %641 = vmatprep.subr.bf16.mxu0 0
        %642 = vmatpush1.bf16.msra.mxu0 %v621
        %643 = vmatprep.subr.bf16.mxu0 0
        %644 = vmatpush1.bf16.msra.mxu0 %v622
        %645 = vmatprep.subr.bf16.mxu0 0
        %646 = vmatpush1.bf16.msra.mxu0 %v623
        %647 = vmatprep.subr.bf16.mxu0 0
        %648 = vmatpush1.bf16.msra.mxu0 %v624
        %649 = vmatprep.subr.bf16.mxu0 0
        %650 = vmatpush1.bf16.msra.mxu0 0
        %651 = vmatprep.subr.bf16.mxu0 0
        %652 = vmatpush1.bf16.msra.mxu0 0
        %653 = vmatprep.subr.bf16.mxu0 0
        %654 = vmatpush1.bf16.msra.mxu0 0
        %655 = vmatprep.subr.bf16.mxu0 0
        %656 = vmatpush1.bf16.msra.mxu0 0
        %657 = vmatprep.subr.bf16.mxu0 0
        %658 = vmatpush1.bf16.msra.mxu0 0
        %659 = vmatprep.subr.bf16.mxu0 0
        %660 = vmatpush1.bf16.msra.mxu0 0
        %661 = vmatprep.subr.bf16.mxu0 0
        %662 = vmatpush1.bf16.msra.mxu0 0
        %663 = vmatprep.subr.bf16.mxu0 0
        %664 = vmatpush1.bf16.msra.mxu0 0
        %665 = vmatprep.mubr.bf16.mxu0 0
        %666 = vmatmul.mubr.bf16.gmra.mrb[0].mxu0 %v579
        %v667 = vpop.f32.mrb[0].mxu0
        %v668 = vadd.f32 0.0, %v667
        %v669 = vpop.f32.mrb[0].mxu0
        %v670 = vpop.f32.mrb[0].mxu0
        %v671 = vadd.f32 0.0, %v670
        %v672 = vpop.f32.mrb[0].mxu0
        %673 = vmatprep.mubr.bf16.mxu0 0
        %674 = vmatmul.mubr.bf16.gmra.mrb[0].mxu0 %v580
        %v675 = vpop.f32.mrb[0].mxu0
        %v676 = vadd.f32 0.0, %v675
        %v677 = vpop.f32.mrb[0].mxu0
        %v678 = vpop.f32.mrb[0].mxu0
        %v679 = vadd.f32 0.0, %v678
        %v680 = vpop.f32.mrb[0].mxu0
        %681 = vmatprep.mubr.bf16.mxu0 0
        %682 = vmatmul.mubr.bf16.gmra.mrb[0].mxu0 %v581
        %v683 = vpop.f32.mrb[0].mxu0
        %v684 = vadd.f32 0.0, %v683
        %v685 = vpop.f32.mrb[0].mxu0
        %v686 = vpop.f32.mrb[0].mxu0
        %v687 = vadd.f32 0.0, %v686
        %v688 = vpop.f32.mrb[0].mxu0
        %689 = vdwg.mxu0
        %v690 = vadd.f32 %v528, %v668
        %v691 = vadd.f32 %v531, %v671
        %v692 = vadd.f32 %v536, %v676
        %v693 = vadd.f32 %v539, %v679
        %v694 = vadd.f32 %v544, %v684
        %v695 = vadd.f32 %v547, %v687
        %s696 = scalar_lea.vmem [#allocation4], 64
        %v697 = vld [vmem:[%s696] sm:$0xf]
        %v698 = vld [vmem:[%s696 + $0x4] sm:$0xf]
        %v699 = vld [vmem:[%s696 + $0x8] sm:$0xf]
        %v700 = vld [vmem:[%s696 + $0xc] sm:$0xf]
        %v701 = vld [vmem:[%s696 + $0x10] sm:$0xf]
        %v702 = vld [vmem:[%s696 + $0x14] sm:$0xf]
        %v703 = vld [vmem:[%s696 + $0x18] sm:$0xf]
        %v704 = vld [vmem:[%s696 + $0x1c] sm:$0xf]
        %v705 = vld [vmem:[%s696 + $0x20] sm:$0xf]
        %v706 = vld [vmem:[%s696 + $0x24] sm:$0xf]
        %v707 = vld [vmem:[%s696 + $0x28] sm:$0xf]
        %v708 = vld [vmem:[%s696 + $0x2c] sm:$0xf]
        %v709 = vld [vmem:[%s696 + $0x30] sm:$0xf]
        %v710 = vld [vmem:[%s696 + $0x34] sm:$0xf]
        %v711 = vld [vmem:[%s696 + $0x38] sm:$0xf]
        %v712 = vld [vmem:[%s696 + $0x3c] sm:$0xf]
        %s713 = scalar_lea.vmem [#allocation4], 256
        %v714 = vld [vmem:[%s713] sm:$0xf]
        %v715 = vld [vmem:[%s713 + $0x4] sm:$0xf]
        %v716 = vld [vmem:[%s713 + $0x8] sm:$0xf]
        %v717 = vld [vmem:[%s713 + $0xc] sm:$0xf]
        %v718 = vld [vmem:[%s713 + $0x10] sm:$0xf]
        %v719 = vld [vmem:[%s713 + $0x14] sm:$0xf]
        %v720 = vld [vmem:[%s713 + $0x18] sm:$0xf]
        %v721 = vld [vmem:[%s713 + $0x1c] sm:$0xf]
        %v722 = vld [vmem:[%s713 + $0x20] sm:$0xf]
        %v723 = vld [vmem:[%s713 + $0x24] sm:$0xf]
        %v724 = vld [vmem:[%s713 + $0x28] sm:$0xf]
        %v725 = vld [vmem:[%s713 + $0x2c] sm:$0xf]
        %v726 = vld [vmem:[%s713 + $0x30] sm:$0xf]
        %v727 = vld [vmem:[%s713 + $0x34] sm:$0xf]
        %v728 = vld [vmem:[%s713 + $0x38] sm:$0xf]
        %v729 = vld [vmem:[%s713 + $0x3c] sm:$0xf]
        %v746 = vunpack.c.l.b16 %v714
        %v747 = vunpack.c.l.b16 %v715
        %v748 = vunpack.c.l.b16 %v716
        %v749 = vunpack.c.l.b16 %v717
        %v750 = vunpack.c.l.b16 %v718
        %v751 = vunpack.c.l.b16 %v719
        %v752 = vunpack.c.l.b16 %v720
        %v753 = vunpack.c.l.b16 %v721
        %v754 = vunpack.c.l.b16 %v722
        %v755 = vunpack.c.l.b16 %v723
        %v756 = vunpack.c.l.b16 %v724
        %v757 = vunpack.c.l.b16 %v725
        %v758 = vunpack.c.l.b16 %v726
        %v759 = vunpack.c.l.b16 %v727
        %v760 = vunpack.c.l.b16 %v728
        %v761 = vunpack.c.l.b16 %v729
        %v762 = vpack.c.b16 %v747, %v746
        %v763 = vpack.c.b16 %v749, %v748
        %v764 = vpack.c.b16 %v751, %v750
        %v765 = vpack.c.b16 %v753, %v752
        %v766 = vpack.c.b16 %v755, %v754
        %v767 = vpack.c.b16 %v757, %v756
        %v768 = vpack.c.b16 %v759, %v758
        %v769 = vpack.c.b16 %v761, %v760
        %778 = vmatprep.subr.bf16.mxu0 0
        %779 = vmatpush1.bf16.msra.mxu0 %v762
        %780 = vmatprep.subr.bf16.mxu0 0
        %781 = vmatpush1.bf16.msra.mxu0 %v763
        %782 = vmatprep.subr.bf16.mxu0 0
        %783 = vmatpush1.bf16.msra.mxu0 %v764
        %784 = vmatprep.subr.bf16.mxu0 0
        %785 = vmatpush1.bf16.msra.mxu0 %v765
        %786 = vmatprep.subr.bf16.mxu0 0
        %787 = vmatpush1.bf16.msra.mxu0 %v766
        %788 = vmatprep.subr.bf16.mxu0 0
        %789 = vmatpush1.bf16.msra.mxu0 %v767
        %790 = vmatprep.subr.bf16.mxu0 0
        %791 = vmatpush1.bf16.msra.mxu0 %v768
        %792 = vmatprep.subr.bf16.mxu0 0
        %793 = vmatpush1.bf16.msra.mxu0 %v769
        %794 = vmatprep.subr.bf16.mxu0 0
        %795 = vmatpush1.bf16.msra.mxu0 0
        %796 = vmatprep.subr.bf16.mxu0 0
        %797 = vmatpush1.bf16.msra.mxu0 0
        %798 = vmatprep.subr.bf16.mxu0 0
        %799 = vmatpush1.bf16.msra.mxu0 0
        %800 = vmatprep.subr.bf16.mxu0 0
        %801 = vmatpush1.bf16.msra.mxu0 0
        %802 = vmatprep.subr.bf16.mxu0 0
        %803 = vmatpush1.bf16.msra.mxu0 0
        %804 = vmatprep.subr.bf16.mxu0 0
        %805 = vmatpush1.bf16.msra.mxu0 0
        %806 = vmatprep.subr.bf16.mxu0 0
        %807 = vmatpush1.bf16.msra.mxu0 0
        %808 = vmatprep.subr.bf16.mxu0 0
        %809 = vmatpush1.bf16.msra.mxu0 0
        %810 = vmatprep.mubr.bf16.mxu0 0
        %811 = vmatmul.mubr.bf16.gmra.mrb[0].mxu0 %v316
        %v812 = vpop.f32.mrb[0].mxu0
        %v813 = vadd.f32 0.0, %v812
        %v814 = vpop.f32.mrb[0].mxu0
        %v815 = vpop.f32.mrb[0].mxu0
        %v816 = vadd.f32 0.0, %v815
        %v817 = vpop.f32.mrb[0].mxu0
        %818 = vmatprep.mubr.bf16.mxu0 0
        %819 = vmatmul.mubr.bf16.gmra.mrb[0].mxu0 %v317
        %v820 = vpop.f32.mrb[0].mxu0
        %v821 = vadd.f32 0.0, %v820
        %v822 = vpop.f32.mrb[0].mxu0
        %v823 = vpop.f32.mrb[0].mxu0
        %v824 = vadd.f32 0.0, %v823
        %v825 = vpop.f32.mrb[0].mxu0
        %826 = vmatprep.mubr.bf16.mxu0 0
        %827 = vmatmul.mubr.bf16.gmra.mrb[0].mxu0 %v318
        %v828 = vpop.f32.mrb[0].mxu0
        %v829 = vadd.f32 0.0, %v828
        %v830 = vpop.f32.mrb[0].mxu0
        %v831 = vpop.f32.mrb[0].mxu0
        %v832 = vadd.f32 0.0, %v831
        %v833 = vpop.f32.mrb[0].mxu0
        %834 = vdwg.mxu0
        %v851 = vunpack.c.l.b16 %v697
        %v852 = vunpack.c.l.b16 %v698
        %v853 = vunpack.c.l.b16 %v699
        %v854 = vunpack.c.l.b16 %v700
        %v855 = vunpack.c.l.b16 %v701
        %v856 = vunpack.c.l.b16 %v702
        %v857 = vunpack.c.l.b16 %v703
        %v858 = vunpack.c.l.b16 %v704
        %v859 = vunpack.c.l.b16 %v705
        %v860 = vunpack.c.l.b16 %v706
        %v861 = vunpack.c.l.b16 %v707
        %v862 = vunpack.c.l.b16 %v708
        %v863 = vunpack.c.l.b16 %v709
        %v864 = vunpack.c.l.b16 %v710
        %v865 = vunpack.c.l.b16 %v711
        %v866 = vunpack.c.l.b16 %v712
        %v867 = vpack.c.b16 %v852, %v851
        %v868 = vpack.c.b16 %v854, %v853
        %v869 = vpack.c.b16 %v856, %v855
        %v870 = vpack.c.b16 %v858, %v857
        %v871 = vpack.c.b16 %v860, %v859
        %v872 = vpack.c.b16 %v862, %v861
        %v873 = vpack.c.b16 %v864, %v863
        %v874 = vpack.c.b16 %v866, %v865
        %883 = vmatprep.subr.bf16.mxu0 0
        %884 = vmatpush1.bf16.msra.mxu0 %v867
        %885 = vmatprep.subr.bf16.mxu0 0
        %886 = vmatpush1.bf16.msra.mxu0 %v868
        %887 = vmatprep.subr.bf16.mxu0 0
        %888 = vmatpush1.bf16.msra.mxu0 %v869
        %889 = vmatprep.subr.bf16.mxu0 0
        %890 = vmatpush1.bf16.msra.mxu0 %v870
        %891 = vmatprep.subr.bf16.mxu0 0
        %892 = vmatpush1.bf16.msra.mxu0 %v871
        %893 = vmatprep.subr.bf16.mxu0 0
        %894 = vmatpush1.bf16.msra.mxu0 %v872
        %895 = vmatprep.subr.bf16.mxu0 0
        %896 = vmatpush1.bf16.msra.mxu0 %v873
        %897 = vmatprep.subr.bf16.mxu0 0
        %898 = vmatpush1.bf16.msra.mxu0 %v874
        %899 = vmatprep.subr.bf16.mxu0 0
        %900 = vmatpush1.bf16.msra.mxu0 0
        %901 = vmatprep.subr.bf16.mxu0 0
        %902 = vmatpush1.bf16.msra.mxu0 0
        %903 = vmatprep.subr.bf16.mxu0 0
        %904 = vmatpush1.bf16.msra.mxu0 0
        %905 = vmatprep.subr.bf16.mxu0 0
        %906 = vmatpush1.bf16.msra.mxu0 0
        %907 = vmatprep.subr.bf16.mxu0 0
        %908 = vmatpush1.bf16.msra.mxu0 0
        %909 = vmatprep.subr.bf16.mxu0 0
        %910 = vmatpush1.bf16.msra.mxu0 0
        %911 = vmatprep.subr.bf16.mxu0 0
        %912 = vmatpush1.bf16.msra.mxu0 0
        %913 = vmatprep.subr.bf16.mxu0 0
        %914 = vmatpush1.bf16.msra.mxu0 0
        %915 = vmatprep.mubr.bf16.mxu0 0
        %916 = vmatmul.mubr.bf16.gmra.mrb[0].mxu0 %v439
        %v917 = vpop.f32.mrb[0].mxu0
        %v918 = vadd.f32 %v813, %v917
        %v919 = vpop.f32.mrb[0].mxu0
        %v920 = vpop.f32.mrb[0].mxu0
        %v921 = vadd.f32 %v816, %v920
        %v922 = vpop.f32.mrb[0].mxu0
        %923 = vmatprep.mubr.bf16.mxu0 0
        %924 = vmatmul.mubr.bf16.gmra.mrb[0].mxu0 %v440
        %v925 = vpop.f32.mrb[0].mxu0
        %v926 = vadd.f32 %v821, %v925
        %v927 = vpop.f32.mrb[0].mxu0
        %v928 = vpop.f32.mrb[0].mxu0
        %v929 = vadd.f32 %v824, %v928
        %v930 = vpop.f32.mrb[0].mxu0
        %931 = vmatprep.mubr.bf16.mxu0 0
        %932 = vmatmul.mubr.bf16.gmra.mrb[0].mxu0 %v441
        %v933 = vpop.f32.mrb[0].mxu0
        %v934 = vadd.f32 %v829, %v933
        %v935 = vpop.f32.mrb[0].mxu0
        %v936 = vpop.f32.mrb[0].mxu0
        %v937 = vadd.f32 %v832, %v936
        %v938 = vpop.f32.mrb[0].mxu0
        %939 = vdwg.mxu0
        %s940 = scalar_lea.vmem [#allocation4], 448
        %v941 = vld [vmem:[%s940] sm:$0xf]
        %v942 = vld [vmem:[%s940 + $0x4] sm:$0xf]
        %v943 = vld [vmem:[%s940 + $0x8] sm:$0xf]
        %v944 = vld [vmem:[%s940 + $0xc] sm:$0xf]
        %v945 = vld [vmem:[%s940 + $0x10] sm:$0xf]
        %v946 = vld [vmem:[%s940 + $0x14] sm:$0xf]
        %v947 = vld [vmem:[%s940 + $0x18] sm:$0xf]
        %v948 = vld [vmem:[%s940 + $0x1c] sm:$0xf]
        %v949 = vld [vmem:[%s940 + $0x20] sm:$0xf]
        %v950 = vld [vmem:[%s940 + $0x24] sm:$0xf]
        %v951 = vld [vmem:[%s940 + $0x28] sm:$0xf]
        %v952 = vld [vmem:[%s940 + $0x2c] sm:$0xf]
        %v953 = vld [vmem:[%s940 + $0x30] sm:$0xf]
        %v954 = vld [vmem:[%s940 + $0x34] sm:$0xf]
        %v955 = vld [vmem:[%s940 + $0x38] sm:$0xf]
        %v956 = vld [vmem:[%s940 + $0x3c] sm:$0xf]
        %v973 = vunpack.c.l.b16 %v941
        %v974 = vunpack.c.l.b16 %v942
        %v975 = vunpack.c.l.b16 %v943
        %v976 = vunpack.c.l.b16 %v944
        %v977 = vunpack.c.l.b16 %v945
        %v978 = vunpack.c.l.b16 %v946
        %v979 = vunpack.c.l.b16 %v947
        %v980 = vunpack.c.l.b16 %v948
        %v981 = vunpack.c.l.b16 %v949
        %v982 = vunpack.c.l.b16 %v950
        %v983 = vunpack.c.l.b16 %v951
        %v984 = vunpack.c.l.b16 %v952
        %v985 = vunpack.c.l.b16 %v953
        %v986 = vunpack.c.l.b16 %v954
        %v987 = vunpack.c.l.b16 %v955
        %v988 = vunpack.c.l.b16 %v956
        %v989 = vpack.c.b16 %v974, %v973
        %v990 = vpack.c.b16 %v976, %v975
        %v991 = vpack.c.b16 %v978, %v977
        %v992 = vpack.c.b16 %v980, %v979
        %v993 = vpack.c.b16 %v982, %v981
        %v994 = vpack.c.b16 %v984, %v983
        %v995 = vpack.c.b16 %v986, %v985
        %v996 = vpack.c.b16 %v988, %v987
        %1005 = vmatprep.subr.bf16.mxu0 0
        %1006 = vmatpush1.bf16.msra.mxu0 %v989
        %1007 = vmatprep.subr.bf16.mxu0 0
        %1008 = vmatpush1.bf16.msra.mxu0 %v990
        %1009 = vmatprep.subr.bf16.mxu0 0
        %1010 = vmatpush1.bf16.msra.mxu0 %v991
        %1011 = vmatprep.subr.bf16.mxu0 0
        %1012 = vmatpush1.bf16.msra.mxu0 %v992
        %1013 = vmatprep.subr.bf16.mxu0 0
        %1014 = vmatpush1.bf16.msra.mxu0 %v993
        %1015 = vmatprep.subr.bf16.mxu0 0
        %1016 = vmatpush1.bf16.msra.mxu0 %v994
        %1017 = vmatprep.subr.bf16.mxu0 0
        %1018 = vmatpush1.bf16.msra.mxu0 %v995
        %1019 = vmatprep.subr.bf16.mxu0 0
        %1020 = vmatpush1.bf16.msra.mxu0 %v996
        %1021 = vmatprep.subr.bf16.mxu0 0
        %1022 = vmatpush1.bf16.msra.mxu0 0
        %1023 = vmatprep.subr.bf16.mxu0 0
        %1024 = vmatpush1.bf16.msra.mxu0 0
        %1025 = vmatprep.subr.bf16.mxu0 0
        %1026 = vmatpush1.bf16.msra.mxu0 0
        %1027 = vmatprep.subr.bf16.mxu0 0
        %1028 = vmatpush1.bf16.msra.mxu0 0
        %1029 = vmatprep.subr.bf16.mxu0 0
        %1030 = vmatpush1.bf16.msra.mxu0 0
        %1031 = vmatprep.subr.bf16.mxu0 0
        %1032 = vmatpush1.bf16.msra.mxu0 0
        %1033 = vmatprep.subr.bf16.mxu0 0
        %1034 = vmatpush1.bf16.msra.mxu0 0
        %1035 = vmatprep.subr.bf16.mxu0 0
        %1036 = vmatpush1.bf16.msra.mxu0 0
        %1037 = vmatprep.mubr.bf16.mxu0 0
        %1038 = vmatmul.mubr.bf16.gmra.mrb[0].mxu0 %v579
        %v1039 = vpop.f32.mrb[0].mxu0
        %v1040 = vadd.f32 0.0, %v1039
        %v1041 = vpop.f32.mrb[0].mxu0
        %v1042 = vpop.f32.mrb[0].mxu0
        %v1043 = vadd.f32 0.0, %v1042
        %v1044 = vpop.f32.mrb[0].mxu0
        %1045 = vmatprep.mubr.bf16.mxu0 0
        %1046 = vmatmul.mubr.bf16.gmra.mrb[0].mxu0 %v580
        %v1047 = vpop.f32.mrb[0].mxu0
        %v1048 = vadd.f32 0.0, %v1047
        %v1049 = vpop.f32.mrb[0].mxu0
        %v1050 = vpop.f32.mrb[0].mxu0
        %v1051 = vadd.f32 0.0, %v1050
        %v1052 = vpop.f32.mrb[0].mxu0
        %1053 = vmatprep.mubr.bf16.mxu0 0
        %1054 = vmatmul.mubr.bf16.gmra.mrb[0].mxu0 %v581
        %v1055 = vpop.f32.mrb[0].mxu0
        %v1056 = vadd.f32 0.0, %v1055
        %v1057 = vpop.f32.mrb[0].mxu0
        %v1058 = vpop.f32.mrb[0].mxu0
        %v1059 = vadd.f32 0.0, %v1058
        %v1060 = vpop.f32.mrb[0].mxu0
        %1061 = vdwg.mxu0
        %v1062 = vadd.f32 %v918, %v1040
        %v1063 = vadd.f32 %v921, %v1043
        %v1064 = vadd.f32 %v926, %v1048
        %v1065 = vadd.f32 %v929, %v1051
        %v1066 = vadd.f32 %v934, %v1056
        %v1067 = vadd.f32 %v937, %v1059
        %s1068 = scalar_lea.vmem [#allocation4], 128
        %v1069 = vld [vmem:[%s1068] sm:$0xf]
        %v1070 = vld [vmem:[%s1068 + $0x4] sm:$0xf]
        %v1071 = vld [vmem:[%s1068 + $0x8] sm:$0xf]
        %v1072 = vld [vmem:[%s1068 + $0xc] sm:$0xf]
        %v1073 = vld [vmem:[%s1068 + $0x10] sm:$0xf]
        %v1074 = vld [vmem:[%s1068 + $0x14] sm:$0xf]
        %v1075 = vld [vmem:[%s1068 + $0x18] sm:$0xf]
        %v1076 = vld [vmem:[%s1068 + $0x1c] sm:$0xf]
        %v1077 = vld [vmem:[%s1068 + $0x20] sm:$0xf]
        %v1078 = vld [vmem:[%s1068 + $0x24] sm:$0xf]
        %v1079 = vld [vmem:[%s1068 + $0x28] sm:$0xf]
        %v1080 = vld [vmem:[%s1068 + $0x2c] sm:$0xf]
        %v1081 = vld [vmem:[%s1068 + $0x30] sm:$0xf]
        %v1082 = vld [vmem:[%s1068 + $0x34] sm:$0xf]
        %v1083 = vld [vmem:[%s1068 + $0x38] sm:$0xf]
        %v1084 = vld [vmem:[%s1068 + $0x3c] sm:$0xf]
        %s1085 = scalar_lea.vmem [#allocation4], 320
        %v1086 = vld [vmem:[%s1085] sm:$0xf]
        %v1087 = vld [vmem:[%s1085 + $0x4] sm:$0xf]
        %v1088 = vld [vmem:[%s1085 + $0x8] sm:$0xf]
        %v1089 = vld [vmem:[%s1085 + $0xc] sm:$0xf]
        %v1090 = vld [vmem:[%s1085 + $0x10] sm:$0xf]
        %v1091 = vld [vmem:[%s1085 + $0x14] sm:$0xf]
        %v1092 = vld [vmem:[%s1085 + $0x18] sm:$0xf]
        %v1093 = vld [vmem:[%s1085 + $0x1c] sm:$0xf]
        %v1094 = vld [vmem:[%s1085 + $0x20] sm:$0xf]
        %v1095 = vld [vmem:[%s1085 + $0x24] sm:$0xf]
        %v1096 = vld [vmem:[%s1085 + $0x28] sm:$0xf]
        %v1097 = vld [vmem:[%s1085 + $0x2c] sm:$0xf]
        %v1098 = vld [vmem:[%s1085 + $0x30] sm:$0xf]
        %v1099 = vld [vmem:[%s1085 + $0x34] sm:$0xf]
        %v1100 = vld [vmem:[%s1085 + $0x38] sm:$0xf]
        %v1101 = vld [vmem:[%s1085 + $0x3c] sm:$0xf]
        %v1118 = vunpack.c.l.b16 %v1086
        %v1119 = vunpack.c.l.b16 %v1087
        %v1120 = vunpack.c.l.b16 %v1088
        %v1121 = vunpack.c.l.b16 %v1089
        %v1122 = vunpack.c.l.b16 %v1090
        %v1123 = vunpack.c.l.b16 %v1091
        %v1124 = vunpack.c.l.b16 %v1092
        %v1125 = vunpack.c.l.b16 %v1093
        %v1126 = vunpack.c.l.b16 %v1094
        %v1127 = vunpack.c.l.b16 %v1095
        %v1128 = vunpack.c.l.b16 %v1096
        %v1129 = vunpack.c.l.b16 %v1097
        %v1130 = vunpack.c.l.b16 %v1098
        %v1131 = vunpack.c.l.b16 %v1099
        %v1132 = vunpack.c.l.b16 %v1100
        %v1133 = vunpack.c.l.b16 %v1101
        %v1134 = vpack.c.b16 %v1119, %v1118
        %v1135 = vpack.c.b16 %v1121, %v1120
        %v1136 = vpack.c.b16 %v1123, %v1122
        %v1137 = vpack.c.b16 %v1125, %v1124
        %v1138 = vpack.c.b16 %v1127, %v1126
        %v1139 = vpack.c.b16 %v1129, %v1128
        %v1140 = vpack.c.b16 %v1131, %v1130
        %v1141 = vpack.c.b16 %v1133, %v1132
        %1150 = vmatprep.subr.bf16.mxu0 0
        %1151 = vmatpush1.bf16.msra.mxu0 %v1134
        %1152 = vmatprep.subr.bf16.mxu0 0
        %1153 = vmatpush1.bf16.msra.mxu0 %v1135
        %1154 = vmatprep.subr.bf16.mxu0 0
        %1155 = vmatpush1.bf16.msra.mxu0 %v1136
        %1156 = vmatprep.subr.bf16.mxu0 0
        %1157 = vmatpush1.bf16.msra.mxu0 %v1137
        %1158 = vmatprep.subr.bf16.mxu0 0
        %1159 = vmatpush1.bf16.msra.mxu0 %v1138
        %1160 = vmatprep.subr.bf16.mxu0 0
        %1161 = vmatpush1.bf16.msra.mxu0 %v1139
        %1162 = vmatprep.subr.bf16.mxu0 0
        %1163 = vmatpush1.bf16.msra.mxu0 %v1140
        %1164 = vmatprep.subr.bf16.mxu0 0
        %1165 = vmatpush1.bf16.msra.mxu0 %v1141
        %1166 = vmatprep.subr.bf16.mxu0 0
        %1167 = vmatpush1.bf16.msra.mxu0 0
        %1168 = vmatprep.subr.bf16.mxu0 0
        %1169 = vmatpush1.bf16.msra.mxu0 0
        %1170 = vmatprep.subr.bf16.mxu0 0
        %1171 = vmatpush1.bf16.msra.mxu0 0
        %1172 = vmatprep.subr.bf16.mxu0 0
        %1173 = vmatpush1.bf16.msra.mxu0 0
        %1174 = vmatprep.subr.bf16.mxu0 0
        %1175 = vmatpush1.bf16.msra.mxu0 0
        %1176 = vmatprep.subr.bf16.mxu0 0
        %1177 = vmatpush1.bf16.msra.mxu0 0
        %1178 = vmatprep.subr.bf16.mxu0 0
        %1179 = vmatpush1.bf16.msra.mxu0 0
        %1180 = vmatprep.subr.bf16.mxu0 0
        %1181 = vmatpush1.bf16.msra.mxu0 0
        %1182 = vmatprep.mubr.bf16.mxu0 0
        %1183 = vmatmul.mubr.bf16.gmra.mrb[0].mxu0 %v316
        %v1184 = vpop.f32.mrb[0].mxu0
        %v1185 = vadd.f32 0.0, %v1184
        %v1186 = vpop.f32.mrb[0].mxu0
        %v1187 = vpop.f32.mrb[0].mxu0
        %v1188 = vadd.f32 0.0, %v1187
        %v1189 = vpop.f32.mrb[0].mxu0
        %1190 = vmatprep.mubr.bf16.mxu0 0
        %1191 = vmatmul.mubr.bf16.gmra.mrb[0].mxu0 %v317
        %v1192 = vpop.f32.mrb[0].mxu0
        %v1193 = vadd.f32 0.0, %v1192
        %v1194 = vpop.f32.mrb[0].mxu0
        %v1195 = vpop.f32.mrb[0].mxu0
        %v1196 = vadd.f32 0.0, %v1195
        %v1197 = vpop.f32.mrb[0].mxu0
        %1198 = vmatprep.mubr.bf16.mxu0 0
        %1199 = vmatmul.mubr.bf16.gmra.mrb[0].mxu0 %v318
        %v1200 = vpop.f32.mrb[0].mxu0
        %v1201 = vadd.f32 0.0, %v1200
        %v1202 = vpop.f32.mrb[0].mxu0
        %v1203 = vpop.f32.mrb[0].mxu0
        %v1204 = vadd.f32 0.0, %v1203
        %v1205 = vpop.f32.mrb[0].mxu0
        %1206 = vdwg.mxu0
        %v1223 = vunpack.c.l.b16 %v1069
        %v1224 = vunpack.c.l.b16 %v1070
        %v1225 = vunpack.c.l.b16 %v1071
        %v1226 = vunpack.c.l.b16 %v1072
        %v1227 = vunpack.c.l.b16 %v1073
        %v1228 = vunpack.c.l.b16 %v1074
        %v1229 = vunpack.c.l.b16 %v1075
        %v1230 = vunpack.c.l.b16 %v1076
        %v1231 = vunpack.c.l.b16 %v1077
        %v1232 = vunpack.c.l.b16 %v1078
        %v1233 = vunpack.c.l.b16 %v1079
        %v1234 = vunpack.c.l.b16 %v1080
        %v1235 = vunpack.c.l.b16 %v1081
        %v1236 = vunpack.c.l.b16 %v1082
        %v1237 = vunpack.c.l.b16 %v1083
        %v1238 = vunpack.c.l.b16 %v1084
        %v1239 = vpack.c.b16 %v1224, %v1223
        %v1240 = vpack.c.b16 %v1226, %v1225
        %v1241 = vpack.c.b16 %v1228, %v1227
        %v1242 = vpack.c.b16 %v1230, %v1229
        %v1243 = vpack.c.b16 %v1232, %v1231
        %v1244 = vpack.c.b16 %v1234, %v1233
        %v1245 = vpack.c.b16 %v1236, %v1235
        %v1246 = vpack.c.b16 %v1238, %v1237
        %1255 = vmatprep.subr.bf16.mxu0 0
        %1256 = vmatpush1.bf16.msra.mxu0 %v1239
        %1257 = vmatprep.subr.bf16.mxu0 0
        %1258 = vmatpush1.bf16.msra.mxu0 %v1240
        %1259 = vmatprep.subr.bf16.mxu0 0
        %1260 = vmatpush1.bf16.msra.mxu0 %v1241
        %1261 = vmatprep.subr.bf16.mxu0 0
        %1262 = vmatpush1.bf16.msra.mxu0 %v1242
        %1263 = vmatprep.subr.bf16.mxu0 0
        %1264 = vmatpush1.bf16.msra.mxu0 %v1243
        %1265 = vmatprep.subr.bf16.mxu0 0
        %1266 = vmatpush1.bf16.msra.mxu0 %v1244
        %1267 = vmatprep.subr.bf16.mxu0 0
        %1268 = vmatpush1.bf16.msra.mxu0 %v1245
        %1269 = vmatprep.subr.bf16.mxu0 0
        %1270 = vmatpush1.bf16.msra.mxu0 %v1246
        %1271 = vmatprep.subr.bf16.mxu0 0
        %1272 = vmatpush1.bf16.msra.mxu0 0
        %1273 = vmatprep.subr.bf16.mxu0 0
        %1274 = vmatpush1.bf16.msra.mxu0 0
        %1275 = vmatprep.subr.bf16.mxu0 0
        %1276 = vmatpush1.bf16.msra.mxu0 0
        %1277 = vmatprep.subr.bf16.mxu0 0
        %1278 = vmatpush1.bf16.msra.mxu0 0
        %1279 = vmatprep.subr.bf16.mxu0 0
        %1280 = vmatpush1.bf16.msra.mxu0 0
        %1281 = vmatprep.subr.bf16.mxu0 0
        %1282 = vmatpush1.bf16.msra.mxu0 0
        %1283 = vmatprep.subr.bf16.mxu0 0
        %1284 = vmatpush1.bf16.msra.mxu0 0
        %1285 = vmatprep.subr.bf16.mxu0 0
        %1286 = vmatpush1.bf16.msra.mxu0 0
        %1287 = vmatprep.mubr.bf16.mxu0 0
        %1288 = vmatmul.mubr.bf16.gmra.mrb[0].mxu0 %v439
        %v1289 = vpop.f32.mrb[0].mxu0
        %v1290 = vadd.f32 %v1185, %v1289
        %v1291 = vpop.f32.mrb[0].mxu0
        %v1292 = vpop.f32.mrb[0].mxu0
        %v1293 = vadd.f32 %v1188, %v1292
        %v1294 = vpop.f32.mrb[0].mxu0
        %1295 = vmatprep.mubr.bf16.mxu0 0
        %1296 = vmatmul.mubr.bf16.gmra.mrb[0].mxu0 %v440
        %v1297 = vpop.f32.mrb[0].mxu0
        %v1298 = vadd.f32 %v1193, %v1297
        %v1299 = vpop.f32.mrb[0].mxu0
        %v1300 = vpop.f32.mrb[0].mxu0
        %v1301 = vadd.f32 %v1196, %v1300
        %v1302 = vpop.f32.mrb[0].mxu0
        %1303 = vmatprep.mubr.bf16.mxu0 0
        %1304 = vmatmul.mubr.bf16.gmra.mrb[0].mxu0 %v441
        %v1305 = vpop.f32.mrb[0].mxu0
        %v1306 = vadd.f32 %v1201, %v1305
        %v1307 = vpop.f32.mrb[0].mxu0
        %v1308 = vpop.f32.mrb[0].mxu0
        %v1309 = vadd.f32 %v1204, %v1308
        %v1310 = vpop.f32.mrb[0].mxu0
        %1311 = vdwg.mxu0
        %s1312 = scalar_lea.vmem [#allocation4], 512
        %v1313 = vld [vmem:[%s1312] sm:$0xf]
        %v1314 = vld [vmem:[%s1312 + $0x4] sm:$0xf]
        %v1315 = vld [vmem:[%s1312 + $0x8] sm:$0xf]
        %v1316 = vld [vmem:[%s1312 + $0xc] sm:$0xf]
        %v1317 = vld [vmem:[%s1312 + $0x10] sm:$0xf]
        %v1318 = vld [vmem:[%s1312 + $0x14] sm:$0xf]
        %v1319 = vld [vmem:[%s1312 + $0x18] sm:$0xf]
        %v1320 = vld [vmem:[%s1312 + $0x1c] sm:$0xf]
        %v1321 = vld [vmem:[%s1312 + $0x20] sm:$0xf]
        %v1322 = vld [vmem:[%s1312 + $0x24] sm:$0xf]
        %v1323 = vld [vmem:[%s1312 + $0x28] sm:$0xf]
        %v1324 = vld [vmem:[%s1312 + $0x2c] sm:$0xf]
        %v1325 = vld [vmem:[%s1312 + $0x30] sm:$0xf]
        %v1326 = vld [vmem:[%s1312 + $0x34] sm:$0xf]
        %v1327 = vld [vmem:[%s1312 + $0x38] sm:$0xf]
        %v1328 = vld [vmem:[%s1312 + $0x3c] sm:$0xf]
        %v1345 = vunpack.c.l.b16 %v1313
        %v1346 = vunpack.c.l.b16 %v1314
        %v1347 = vunpack.c.l.b16 %v1315
        %v1348 = vunpack.c.l.b16 %v1316
        %v1349 = vunpack.c.l.b16 %v1317
        %v1350 = vunpack.c.l.b16 %v1318
        %v1351 = vunpack.c.l.b16 %v1319
        %v1352 = vunpack.c.l.b16 %v1320
        %v1353 = vunpack.c.l.b16 %v1321
        %v1354 = vunpack.c.l.b16 %v1322
        %v1355 = vunpack.c.l.b16 %v1323
        %v1356 = vunpack.c.l.b16 %v1324
        %v1357 = vunpack.c.l.b16 %v1325
        %v1358 = vunpack.c.l.b16 %v1326
        %v1359 = vunpack.c.l.b16 %v1327
        %v1360 = vunpack.c.l.b16 %v1328
        %v1361 = vpack.c.b16 %v1346, %v1345
        %v1362 = vpack.c.b16 %v1348, %v1347
        %v1363 = vpack.c.b16 %v1350, %v1349
        %v1364 = vpack.c.b16 %v1352, %v1351
        %v1365 = vpack.c.b16 %v1354, %v1353
        %v1366 = vpack.c.b16 %v1356, %v1355
        %v1367 = vpack.c.b16 %v1358, %v1357
        %v1368 = vpack.c.b16 %v1360, %v1359
        %1377 = vmatprep.subr.bf16.mxu0 0
        %1378 = vmatpush1.bf16.msra.mxu0 %v1361
        %1379 = vmatprep.subr.bf16.mxu0 0
        %1380 = vmatpush1.bf16.msra.mxu0 %v1362
        %1381 = vmatprep.subr.bf16.mxu0 0
        %1382 = vmatpush1.bf16.msra.mxu0 %v1363
        %1383 = vmatprep.subr.bf16.mxu0 0
        %1384 = vmatpush1.bf16.msra.mxu0 %v1364
        %1385 = vmatprep.subr.bf16.mxu0 0
        %1386 = vmatpush1.bf16.msra.mxu0 %v1365
        %1387 = vmatprep.subr.bf16.mxu0 0
        %1388 = vmatpush1.bf16.msra.mxu0 %v1366
        %1389 = vmatprep.subr.bf16.mxu0 0
        %1390 = vmatpush1.bf16.msra.mxu0 %v1367
        %1391 = vmatprep.subr.bf16.mxu0 0
        %1392 = vmatpush1.bf16.msra.mxu0 %v1368
        %1393 = vmatprep.subr.bf16.mxu0 0
        %1394 = vmatpush1.bf16.msra.mxu0 0
        %1395 = vmatprep.subr.bf16.mxu0 0
        %1396 = vmatpush1.bf16.msra.mxu0 0
        %1397 = vmatprep.subr.bf16.mxu0 0
        %1398 = vmatpush1.bf16.msra.mxu0 0
        %1399 = vmatprep.subr.bf16.mxu0 0
        %1400 = vmatpush1.bf16.msra.mxu0 0
        %1401 = vmatprep.subr.bf16.mxu0 0
        %1402 = vmatpush1.bf16.msra.mxu0 0
        %1403 = vmatprep.subr.bf16.mxu0 0
        %1404 = vmatpush1.bf16.msra.mxu0 0
        %1405 = vmatprep.subr.bf16.mxu0 0
        %1406 = vmatpush1.bf16.msra.mxu0 0
        %1407 = vmatprep.subr.bf16.mxu0 0
        %1408 = vmatpush1.bf16.msra.mxu0 0
        %1409 = vmatprep.mubr.bf16.mxu0 0
        %1410 = vmatmul.mubr.bf16.gmra.mrb[0].mxu0 %v579
        %v1411 = vpop.f32.mrb[0].mxu0
        %v1412 = vadd.f32 0.0, %v1411
        %v1413 = vpop.f32.mrb[0].mxu0
        %v1414 = vpop.f32.mrb[0].mxu0
        %v1415 = vadd.f32 0.0, %v1414
        %v1416 = vpop.f32.mrb[0].mxu0
        %1417 = vmatprep.mubr.bf16.mxu0 0
        %1418 = vmatmul.mubr.bf16.gmra.mrb[0].mxu0 %v580
        %v1419 = vpop.f32.mrb[0].mxu0
        %v1420 = vadd.f32 0.0, %v1419
        %v1421 = vpop.f32.mrb[0].mxu0
        %v1422 = vpop.f32.mrb[0].mxu0
        %v1423 = vadd.f32 0.0, %v1422
        %v1424 = vpop.f32.mrb[0].mxu0
        %1425 = vmatprep.mubr.bf16.mxu0 0
        %1426 = vmatmul.mubr.bf16.gmra.mrb[0].mxu0 %v581
        %v1427 = vpop.f32.mrb[0].mxu0
        %v1428 = vadd.f32 0.0, %v1427
        %v1429 = vpop.f32.mrb[0].mxu0
        %v1430 = vpop.f32.mrb[0].mxu0
        %v1431 = vadd.f32 0.0, %v1430
        %v1432 = vpop.f32.mrb[0].mxu0
        %1433 = vdwg.mxu0
        %v1434 = vadd.f32 %v1290, %v1412
        %v1435 = vadd.f32 %v1293, %v1415
        %v1436 = vadd.f32 %v1298, %v1420
        %v1437 = vadd.f32 %v1301, %v1423
        %v1438 = vadd.f32 %v1306, %v1428
        %v1439 = vadd.f32 %v1309, %v1431
        %v1446 = vrot.slane %v1062, 1
        %v1447 = vrot.slane %v1063, 1
        %v1448 = vrot.slane %v1064, 1
        %v1449 = vrot.slane %v1065, 1
        %v1450 = vrot.slane %v1066, 1
        %v1451 = vrot.slane %v1067, 1
        %v1458 = vadd.f32 %v690, %v1446
        %v1459 = vadd.f32 %v691, %v1447
        %v1460 = vadd.f32 %v692, %v1448
        %v1461 = vadd.f32 %v693, %v1449
        %v1462 = vadd.f32 %v694, %v1450
        %v1463 = vadd.f32 %v695, %v1451
        %v1470 = vrot.slane %v1434, 2
        %v1471 = vrot.slane %v1435, 2
        %v1472 = vrot.slane %v1436, 2
        %v1473 = vrot.slane %v1437, 2
        %v1474 = vrot.slane %v1438, 2
        %v1475 = vrot.slane %v1439, 2
        %v1482 = vadd.f32 %v1458, %v1470
        %v1483 = vadd.f32 %v1459, %v1471
        %v1484 = vadd.f32 %v1460, %v1472
        %v1485 = vadd.f32 %v1461, %v1473
        %v1486 = vadd.f32 %v1462, %v1474
        %v1487 = vadd.f32 %v1463, %v1475
        %v1488 = vld [vmem:[%s241] sm:$0x1]
        %v1489 = vld [vmem:[%s241 + $0x1] sm:$0x1]
        %v1490 = vlaneseq
        %v1491 = vshrl.u32 %v1490, 7
        %v1492 = vsub.s32 0, %v1491
        %v1493 = vrot.slane %v1488, %v1492
        %v1494 = vmul.f32 %v1482, %v1493
        %v1495 = vmul.f32 %v1483, %v1493
        %v1496 = vmul.f32 %v1484, %v1493
        %v1497 = vmul.f32 %v1485, %v1493
        %v1498 = vmul.f32 %v1486, %v1493
        %v1499 = vmul.f32 %v1487, %v1493
        %v1500 = vlaneseq
        %v1501 = vshrl.u32 %v1500, 7
        %v1502 = vsub.s32 0, %v1501
        %v1503 = vrot.slane %v1489, %v1502
        %v1504 = vadd.f32 %v1494, %v1503
        %v1505 = vadd.f32 %v1495, %v1503
        %v1506 = vadd.f32 %v1496, %v1503
        %v1507 = vadd.f32 %v1497, %v1503
        %v1508 = vadd.f32 %v1498, %v1503
        %v1509 = vadd.f32 %v1499, %v1503
        %v1510 = vmax.f32 %v1504, 0.0
        %v1511 = vmax.f32 %v1505, 0.0
        %v1512 = vmax.f32 %v1506, 0.0
        %v1513 = vmax.f32 %v1507, 0.0
        %v1514 = vmax.f32 %v1508, 0.0
        %v1515 = vmax.f32 %v1509, 0.0
        %1516 = vst [vmem:[%s249] sm:$0x3f] %v1510
        %1517 = vst [vmem:[%s249 + $0x8] sm:$0x3f] %v1511
        %1518 = vst [vmem:[%s249 + $0x10] sm:$0x3f] %v1512
        %1519 = vst [vmem:[%s249 + $0x18] sm:$0x3f] %v1513
        %1520 = vst [vmem:[%s249 + $0x20] sm:$0x3f] %v1514
        %1521 = vst [vmem:[%s249 + $0x28] sm:$0x3f] %v1515
        %p1522 = scmp.lt.s32.totalorder %s23, 1
        %s1523 = scalar_select %p1522, %s23, 1
        %p1524 = scmp.lt.s32.totalorder %s22, 0
        %s1525 = scalar_select %p1524, %s22, 0
        %s1526 = smul.addr %s1523, 6
        %s1527 = sadd.s32 %s1525, %s1526
        %s1528 = smul.addr %s1527, 8
        %s1529 = scalar_lea.vmem %s3, %s1528
        // Predicated region
        $region41: #{tpu_custom_call.1} parent=31 // pred_check
          %p1530 = pneg %p128
        $region42: #{tpu_custom_call.1} parent=31 // pred_check_branch
          %1532 = sbr.rel (%p1530) target = $region44
        $region43: #{tpu_custom_call.1} parent=31 // pred_region
          _
        $region44: #{tpu_custom_call.1} parent=31 // pred_fallthru
          _
      $region32: #{tpu_custom_call.1} parent=5 // pred_fallthru
        _
      %p1533 = scmp.le.s32.totalorder 2, %s13
      // Predicated region
      $region45: #{tpu_custom_call.1} parent=5 // pred_check
        %p1534 = pneg %p1533
      $region46: #{tpu_custom_call.1} parent=5 // pred_check_branch
        %1536 = sbr.rel (%p1534) target = $region48
      $region47: #{tpu_custom_call.1} parent=5 // pred_region
        %s1537 = ssub.s32 %s13, 2
        // Predicated region
        $region49: #{tpu_custom_call.1} parent=47 // pred_check
          %p1538 = pneg %p134
        $region50: #{tpu_custom_call.1} parent=47 // pred_check_branch
          %1540 = sbr.rel (%p1538) target = $region52
        $region51: #{tpu_custom_call.1} parent=47 // pred_region
          %p1541 = scmp.lt.s32.totalorder %s25, 1
          %s1542 = scalar_select %p1541, %s25, 1
          %p1543 = scmp.lt.s32.totalorder %s24, 0
          %s1544 = scalar_select %p1543, %s24, 0
          %s1545 = smul.addr %s1542, 6
          %s1546 = sadd.s32 %s1544, %s1545
          %s1547 = smul.addr %s1546, 8
          %s1548 = scalar_lea.vmem %s3, %s1547
        $region52: #{tpu_custom_call.1} parent=47 // pred_fallthru
          _
      $region48: #{tpu_custom_call.1} parent=5 // pred_fallthru
        _
    $region6: #{tpu_custom_call.1} parent=1 // loop_footer
      %s17 = sadd.s32 1, %s13
    $region7: #{tpu_custom_call.1} parent=1 // loop_footer_branch
      %12 = sbr.rel target = $region3
    $region8: #{tpu_custom_call.1} parent=1 // loop_exit
      _
    %1549 = vsyncpa [#allocation3], 1
    %s1550 = scalar_lea.sflag [#allocation3], 1
    %1551 = vsyncpa %s1550, 1
    %1552 = vsyncpa [#allocation5], 1

</llo_original>
